<compile_context>
chip_gen: v5e
topology: v5e:2x2
jax: 0.10.0
libtpu: 0.0.40
codegen_flags: <defaults>
</compile_context>

<pallas_src>
import functools

import jax
import jax.numpy as jnp
from jax.experimental import pallas as pl
from jax.experimental.pallas import tpu as pltpu


def _round_up(x, m):
    return (x + m - 1) // m * m


# ----------------------------- Pallas kernel -------------------------------

def _matmul_bias_act_kernel(x_ref, w_ref, b_ref, o_ref, *, act):
    # bf16 x bf16 -> f32 accumulate on the MXU; epilogue in f32 (VPU/EUP).
    acc = jnp.dot(x_ref[...], w_ref[...], preferred_element_type=jnp.float32)
    acc = acc + b_ref[...]                      # (1, Np) broadcast over rows
    if act == "relu":
        acc = jnp.maximum(acc, 0.0)
    elif act == "sigmoid":
        acc = jax.nn.sigmoid(acc)
    o_ref[...] = acc


def matmul_bias_act(x, w, b, act, *, tm=256):
    """(M,K) @ (K,N) + b then activation; returns f32 (M, N).

    Pads K and N up to multiples of 128 and tiles M so the BlockSpec pipeline
    double-buffers row-tile DMAs against MXU compute.
    """
    M, K = x.shape
    Kw, N = w.shape
    assert K == Kw and b.shape == (N,)

    Kp = _round_up(max(K, 128), 128)
    Np = _round_up(max(N, 128), 128)
    Mp = _round_up(M, 8)
    TM = min(tm, Mp)
    Mp = _round_up(Mp, TM)

    xp = jnp.pad(x, ((0, Mp - M), (0, Kp - K))).astype(jnp.bfloat16)
    wp = jnp.pad(w, ((0, Kp - K), (0, Np - N))).astype(jnp.bfloat16)
    bp = jnp.pad(b, (0, Np - N)).astype(jnp.float32).reshape(1, Np)

    kernel = functools.partial(_matmul_bias_act_kernel, act=act)
    out = pl.pallas_call(
        kernel,
        out_shape=jax.ShapeDtypeStruct((Mp, Np), jnp.float32),
        grid=(Mp // TM,),
        in_specs=[
            pl.BlockSpec((TM, Kp), lambda i: (i, 0)),
            pl.BlockSpec((Kp, Np), lambda i: (0, 0)),   # weight resident
            pl.BlockSpec((1, Np), lambda i: (0, 0)),    # bias resident
        ],
        out_specs=pl.BlockSpec((TM, Np), lambda i: (i, 0)),
        compiler_params=pltpu.CompilerParams(
            dimension_semantics=("parallel",),          # shard M across TCs (v7x)
            vmem_limit_bytes=32 * 1024 * 1024,
        ),
    )(xp, wp, bp)
    return out[:M, :N]


# ------------------------------ JAX glue (NHWC) ------------------------------

def _im2col_nhwc(x, k, stride, pad):
    """x:(N,H,W,C) -> (N*Ho*Wo, k*k*C) with feature order (kh, kw, c)."""
    N, H, W, C = x.shape
    xp = jnp.pad(x, ((0, 0), (pad, pad), (pad, pad), (0, 0)))
    Ho = (H + 2 * pad - k) // stride + 1
    Wo = (W + 2 * pad - k) // stride + 1
    cols = []
    for kh in range(k):
        for kw in range(k):
            cols.append(
                xp[:,
                   kh:kh + stride * (Ho - 1) + 1:stride,
                   kw:kw + stride * (Wo - 1) + 1:stride, :])
    cols = jnp.concatenate(cols, axis=-1)        # (N, Ho, Wo, k*k*C)
    return cols.reshape(N * Ho * Wo, k * k * C), (N, Ho, Wo)


def conv2d_nhwc(x, w, b, *, stride, pad, act):
    """PyTorch Conv2d semantics. x:(N,H,W,Cin), w:(Cout,Cin,k,k) -> (N,Ho,Wo,Cout)."""
    Cout, Cin, k, _ = w.shape
    cols, (N, Ho, Wo) = _im2col_nhwc(x, k, stride, pad)
    wm = jnp.transpose(w, (2, 3, 1, 0)).reshape(k * k * Cin, Cout)  # (kh,kw,c)->Cout
    y = matmul_bias_act(cols, wm, b, act)        # (N*Ho*Wo, Cout)
    return y.reshape(N, Ho, Wo, Cout)


def conv_transpose2d_nhwc(x, w, b, *, stride, pad, act):
    """PyTorch ConvTranspose2d (w:(Cin,Cout,k,k)), specialized to k=4,s=2,p=1.

    Subpixel lowering: output row 2m+a / col 2q+b is a stride-1 2x2 conv of the
    un-dilated input; all four parities are packed into one matmul using a 3x3
    patch window and a (9*Cin, 4*Cout) weight.
    """
    Cin, Cout, k, _ = w.shape
    assert k == 4 and stride == 2 and pad == 1
    N, H, W, C = x.shape
    assert C == Cin

    cols, _ = _im2col_nhwc(x, 3, 1, 1)           # (N*H*W, 9*Cin), order (u,v,c)

    # (u, ky) taps per output-row parity a; same table for columns (v, kx).
    taps = {0: ((0, 3), (1, 1)), 1: ((1, 2), (2, 0))}
    wm = jnp.zeros((3, 3, Cin, 2, 2, Cout), w.dtype)
    for a in (0, 1):
        for (u, ky) in taps[a]:
            for b2 in (0, 1):
                for (v, kx) in taps[b2]:
                    wm = wm.at[u, v, :, a, b2, :].set(w[:, :, ky, kx])
    wm = wm.reshape(9 * Cin, 4 * Cout)           # columns ordered (a, b, o)
    bias4 = jnp.tile(b, 4)                       # bias per parity copy

    y = matmul_bias_act(cols, wm, bias4, act)    # (N*H*W, 4*Cout)
    y = y.reshape(N, H, W, 2, 2, Cout)
    y = y.transpose(0, 1, 3, 2, 4, 5).reshape(N, 2 * H, 2 * W, Cout)
    return y


# ------------------------------ Model ---------------------------------------

def init_params(key):
    ks = jax.random.split(key, 8)
    s = 0.05
    return {
        # encoder (Conv2d weights are (Cout, Cin, k, k))
        "enc1_w": jax.random.normal(ks[0], (64, 3, 4, 4), jnp.float32) * s,
        "enc1_b": jax.random.normal(ks[1], (64,), jnp.float32) * s,
        "enc2_w": jax.random.normal(ks[2], (128, 64, 4, 4), jnp.float32) * s,
        "enc2_b": jax.random.normal(ks[3], (128,), jnp.float32) * s,
        # decoder (ConvTranspose2d weights are (Cin, Cout, k, k))
        "dec1_w": jax.random.normal(ks[4], (128, 64, 4, 4), jnp.float32) * s,
        "dec1_b": jax.random.normal(ks[5], (64,), jnp.float32) * s,
        "dec2_w": jax.random.normal(ks[6], (64, 3, 4, 4), jnp.float32) * s,
        "dec2_b": jax.random.normal(ks[7], (3,), jnp.float32) * s,
    }


def autoencoder_forward(x_nchw, p):
    x = jnp.transpose(x_nchw, (0, 2, 3, 1))      # NCHW -> NHWC once
    # encoder
    x = conv2d_nhwc(x, p["enc1_w"], p["enc1_b"], stride=2, pad=1, act="relu")
    x = conv2d_nhwc(x, p["enc2_w"], p["enc2_b"], stride=2, pad=1, act="relu")
    # decoder
    x = conv_transpose2d_nhwc(x, p["dec1_w"], p["dec1_b"], stride=2, pad=1, act="relu")
    x = conv_transpose2d_nhwc(x, p["dec2_w"], p["dec2_b"], stride=2, pad=1, act="sigmoid")
    return jnp.transpose(x, (0, 3, 1, 2))        # NHWC -> NCHW once


if __name__ == "__main__":
    key = jax.random.PRNGKey(0)
    k_x, k_p = jax.random.split(key)
    x = jax.random.normal(k_x, (2, 3, 16, 16), jnp.float32)   # NCHW like PyTorch
    params = init_params(k_p)

    fwd = jax.jit(autoencoder_forward)
    out = fwd(x, params)
    out = jax.block_until_ready(out)

    assert out.shape == (2, 3, 16, 16), out.shape
    assert bool(jnp.all(jnp.isfinite(out)))
    assert bool(jnp.all((out >= 0.0) & (out <= 1.0)))  # sigmoid output range
    print("KERNEL_OK")
</pallas_src>

<mosaic_0001>
module attributes {stable_mosaic.version = 11 : i64} {
  func.func @_matmul_bias_act_kernel(%arg0: i32, %arg1: memref<128x128xbf16, #tpu.memory_space<vmem>>, %arg2: memref<128x128xbf16, #tpu.memory_space<vmem>>, %arg3: memref<1x128xf32, #tpu.memory_space<vmem>>, %arg4: memref<128x128xf32, #tpu.memory_space<vmem>>) attributes {dimension_semantics = [#tpu.dimension_semantics<parallel>], iteration_bounds = array<i64: 1>, scalar_prefetch = 0 : i64, scratch_operands = 0 : i64, tpu.core_type = #tpu.core_type<tc>, window_params = [{transform_indices = @transform_0, window_bounds = array<i64: 128, 128>}, {pipeline_mode = #tpu.pipeline_mode<synchronous>, transform_indices = @transform_1, window_bounds = array<i64: 128, 128>}, {pipeline_mode = #tpu.pipeline_mode<synchronous>, transform_indices = @transform_2, window_bounds = array<i64: 1, 128>}, {transform_indices = @transform_3, window_bounds = array<i64: 128, 128>}]} {
    %c0 = arith.constant 0 : index
    %c0_0 = arith.constant 0 : index
    %0 = vector.load %arg1[%c0, %c0_0] : memref<128x128xbf16, #tpu.memory_space<vmem>>, vector<128x128xbf16>
    %c0_1 = arith.constant 0 : index
    %c0_2 = arith.constant 0 : index
    %1 = vector.load %arg2[%c0_1, %c0_2] : memref<128x128xbf16, #tpu.memory_space<vmem>>, vector<128x128xbf16>
    %cst = arith.constant dense<0.000000e+00> : vector<128x128xf32>
    %2 = tpu.matmul %0, %1, %cst {dimension_numbers = #tpu.dot_dimension_numbers<[1], [0], [0], [1], [0, 0, 1, 1], [], []>} : vector<128x128xbf16>, vector<128x128xbf16>, vector<128x128xf32> -> vector<128x128xf32>
    %c0_3 = arith.constant 0 : index
    %c0_4 = arith.constant 0 : index
    %3 = vector.load %arg3[%c0_3, %c0_4] : memref<1x128xf32, #tpu.memory_space<vmem>>, vector<1x128xf32>
    %4 = vector.broadcast %3 : vector<1x128xf32> to vector<128x128xf32>
    %5 = arith.addf %2, %4 : vector<128x128xf32>
    %cst_5 = arith.constant 0.000000e+00 : f32
    %6 = vector.broadcast %cst_5 : f32 to vector<128x128xf32>
    %7 = arith.maximumf %5, %6 : vector<128x128xf32>
    %c0_6 = arith.constant 0 : index
    %c0_7 = arith.constant 0 : index
    %8 = vector.load %arg4[%c0_6, %c0_7] : memref<128x128xf32, #tpu.memory_space<vmem>>, vector<128x128xf32>
    tpu.vector_store %arg4[%c0_6, %c0_7], %7 {strides = array<i32>} : memref<128x128xf32, #tpu.memory_space<vmem>>, vector<128x128xf32>,
    return
  }
  func.func @transform_0(%arg0: i32) -> (i32, i32) {
    %c0_i32 = arith.constant 0 : i32
    %c0_i32_0 = arith.constant 0 : i32
    return %arg0, %c0_i32 : i32, i32
  }
  func.func @transform_1(%arg0: i32) -> (i32, i32) {
    %c0_i32 = arith.constant 0 : i32
    %c0_i32_0 = arith.constant 0 : i32
    %c0_i32_1 = arith.constant 0 : i32
    return %c0_i32, %c0_i32_0 : i32, i32
  }
  func.func @transform_2(%arg0: i32) -> (i32, i32) {
    %c0_i32 = arith.constant 0 : i32
    %c0_i32_0 = arith.constant 0 : i32
    %c0_i32_1 = arith.constant 0 : i32
    return %c0_i32, %c0_i32_0 : i32, i32
  }
  func.func @transform_3(%arg0: i32) -> (i32, i32) {
    %c0_i32 = arith.constant 0 : i32
    %c0_i32_0 = arith.constant 0 : i32
    return %arg0, %c0_i32 : i32, i32
  }
}

module attributes {stable_mosaic.version = 11 : i64} {
  func.func @_matmul_bias_act_kernel(%arg0: i32, %arg1: memref<32x1024xbf16, #tpu.memory_space<vmem>>, %arg2: memref<1024x128xbf16, #tpu.memory_space<vmem>>, %arg3: memref<1x128xf32, #tpu.memory_space<vmem>>, %arg4: memref<32x128xf32, #tpu.memory_space<vmem>>) attributes {dimension_semantics = [#tpu.dimension_semantics<parallel>], iteration_bounds = array<i64: 1>, scalar_prefetch = 0 : i64, scratch_operands = 0 : i64, tpu.core_type = #tpu.core_type<tc>, window_params = [{transform_indices = @transform_0, window_bounds = array<i64: 32, 1024>}, {pipeline_mode = #tpu.pipeline_mode<synchronous>, transform_indices = @transform_1, window_bounds = array<i64: 1024, 128>}, {pipeline_mode = #tpu.pipeline_mode<synchronous>, transform_indices = @transform_2, window_bounds = array<i64: 1, 128>}, {transform_indices = @transform_3, window_bounds = array<i64: 32, 128>}]} {
    %c0 = arith.constant 0 : index
    %c0_0 = arith.constant 0 : index
    %0 = vector.load %arg1[%c0, %c0_0] : memref<32x1024xbf16, #tpu.memory_space<vmem>>, vector<32x1024xbf16>
    %c0_1 = arith.constant 0 : index
    %c0_2 = arith.constant 0 : index
    %1 = vector.load %arg2[%c0_1, %c0_2] : memref<1024x128xbf16, #tpu.memory_space<vmem>>, vector<1024x128xbf16>
    %cst = arith.constant dense<0.000000e+00> : vector<32x128xf32>
    %2 = tpu.matmul %0, %1, %cst {dimension_numbers = #tpu.dot_dimension_numbers<[1], [0], [0], [1], [0, 0, 1, 1], [], []>} : vector<32x1024xbf16>, vector<1024x128xbf16>, vector<32x128xf32> -> vector<32x128xf32>
    %c0_3 = arith.constant 0 : index
    %c0_4 = arith.constant 0 : index
    %3 = vector.load %arg3[%c0_3, %c0_4] : memref<1x128xf32, #tpu.memory_space<vmem>>, vector<1x128xf32>
    %4 = vector.broadcast %3 : vector<1x128xf32> to vector<32x128xf32>
    %5 = arith.addf %2, %4 : vector<32x128xf32>
    %cst_5 = arith.constant 0.000000e+00 : f32
    %6 = vector.broadcast %cst_5 : f32 to vector<32x128xf32>
    %7 = arith.maximumf %5, %6 : vector<32x128xf32>
    %c0_6 = arith.constant 0 : index
    %c0_7 = arith.constant 0 : index
    %8 = vector.load %arg4[%c0_6, %c0_7] : memref<32x128xf32, #tpu.memory_space<vmem>>, vector<32x128xf32>
    tpu.vector_store %arg4[%c0_6, %c0_7], %7 {strides = array<i32>} : memref<32x128xf32, #tpu.memory_space<vmem>>, vector<32x128xf32>,
    return
  }
  func.func @transform_0(%arg0: i32) -> (i32, i32) {
    %c0_i32 = arith.constant 0 : i32
    %c0_i32_0 = arith.constant 0 : i32
    return %arg0, %c0_i32 : i32, i32
  }
  func.func @transform_1(%arg0: i32) -> (i32, i32) {
    %c0_i32 = arith.constant 0 : i32
    %c0_i32_0 = arith.constant 0 : i32
    %c0_i32_1 = arith.constant 0 : i32
    return %c0_i32, %c0_i32_0 : i32, i32
  }
  func.func @transform_2(%arg0: i32) -> (i32, i32) {
    %c0_i32 = arith.constant 0 : i32
    %c0_i32_0 = arith.constant 0 : i32
    %c0_i32_1 = arith.constant 0 : i32
    return %c0_i32, %c0_i32_0 : i32, i32
  }
  func.func @transform_3(%arg0: i32) -> (i32, i32) {
    %c0_i32 = arith.constant 0 : i32
    %c0_i32_0 = arith.constant 0 : i32
    return %arg0, %c0_i32 : i32, i32
  }
}

module attributes {stable_mosaic.version = 11 : i64} {
  func.func @_matmul_bias_act_kernel(%arg0: i32, %arg1: memref<32x1152xbf16, #tpu.memory_space<vmem>>, %arg2: memref<1152x256xbf16, #tpu.memory_space<vmem>>, %arg3: memref<1x256xf32, #tpu.memory_space<vmem>>, %arg4: memref<32x256xf32, #tpu.memory_space<vmem>>) attributes {dimension_semantics = [#tpu.dimension_semantics<parallel>], iteration_bounds = array<i64: 1>, scalar_prefetch = 0 : i64, scratch_operands = 0 : i64, tpu.core_type = #tpu.core_type<tc>, window_params = [{transform_indices = @transform_0, window_bounds = array<i64: 32, 1152>}, {pipeline_mode = #tpu.pipeline_mode<synchronous>, transform_indices = @transform_1, window_bounds = array<i64: 1152, 256>}, {pipeline_mode = #tpu.pipeline_mode<synchronous>, transform_indices = @transform_2, window_bounds = array<i64: 1, 256>}, {transform_indices = @transform_3, window_bounds = array<i64: 32, 256>}]} {
    %c0 = arith.constant 0 : index
    %c0_0 = arith.constant 0 : index
    %0 = vector.load %arg1[%c0, %c0_0] : memref<32x1152xbf16, #tpu.memory_space<vmem>>, vector<32x1152xbf16>
    %c0_1 = arith.constant 0 : index
    %c0_2 = arith.constant 0 : index
    %1 = vector.load %arg2[%c0_1, %c0_2] : memref<1152x256xbf16, #tpu.memory_space<vmem>>, vector<1152x256xbf16>
    %cst = arith.constant dense<0.000000e+00> : vector<32x256xf32>
    %2 = tpu.matmul %0, %1, %cst {dimension_numbers = #tpu.dot_dimension_numbers<[1], [0], [0], [1], [0, 0, 1, 1], [], []>} : vector<32x1152xbf16>, vector<1152x256xbf16>, vector<32x256xf32> -> vector<32x256xf32>
    %c0_3 = arith.constant 0 : index
    %c0_4 = arith.constant 0 : index
    %3 = vector.load %arg3[%c0_3, %c0_4] : memref<1x256xf32, #tpu.memory_space<vmem>>, vector<1x256xf32>
    %4 = vector.broadcast %3 : vector<1x256xf32> to vector<32x256xf32>
    %5 = arith.addf %2, %4 : vector<32x256xf32>
    %cst_5 = arith.constant 0.000000e+00 : f32
    %6 = vector.broadcast %cst_5 : f32 to vector<32x256xf32>
    %7 = arith.maximumf %5, %6 : vector<32x256xf32>
    %c0_6 = arith.constant 0 : index
    %c0_7 = arith.constant 0 : index
    %8 = vector.load %arg4[%c0_6, %c0_7] : memref<32x256xf32, #tpu.memory_space<vmem>>, vector<32x256xf32>
    tpu.vector_store %arg4[%c0_6, %c0_7], %7 {strides = array<i32>} : memref<32x256xf32, #tpu.memory_space<vmem>>, vector<32x256xf32>,
    return
  }
  func.func @transform_0(%arg0: i32) -> (i32, i32) {
    %c0_i32 = arith.constant 0 : i32
    %c0_i32_0 = arith.constant 0 : i32
    return %arg0, %c0_i32 : i32, i32
  }
  func.func @transform_1(%arg0: i32) -> (i32, i32) {
    %c0_i32 = arith.constant 0 : i32
    %c0_i32_0 = arith.constant 0 : i32
    %c0_i32_1 = arith.constant 0 : i32
    return %c0_i32, %c0_i32_0 : i32, i32
  }
  func.func @transform_2(%arg0: i32) -> (i32, i32) {
    %c0_i32 = arith.constant 0 : i32
    %c0_i32_0 = arith.constant 0 : i32
    %c0_i32_1 = arith.constant 0 : i32
    return %c0_i32, %c0_i32_0 : i32, i32
  }
  func.func @transform_3(%arg0: i32) -> (i32, i32) {
    %c0_i32 = arith.constant 0 : i32
    %c0_i32_0 = arith.constant 0 : i32
    return %arg0, %c0_i32 : i32, i32
  }
}

module attributes {stable_mosaic.version = 11 : i64} {
  func.func @_matmul_bias_act_kernel(%arg0: i32, %arg1: memref<128x640xbf16, #tpu.memory_space<vmem>>, %arg2: memref<640x128xbf16, #tpu.memory_space<vmem>>, %arg3: memref<1x128xf32, #tpu.memory_space<vmem>>, %arg4: memref<128x128xf32, #tpu.memory_space<vmem>>) attributes {dimension_semantics = [#tpu.dimension_semantics<parallel>], iteration_bounds = array<i64: 1>, scalar_prefetch = 0 : i64, scratch_operands = 0 : i64, tpu.core_type = #tpu.core_type<tc>, window_params = [{transform_indices = @transform_0, window_bounds = array<i64: 128, 640>}, {pipeline_mode = #tpu.pipeline_mode<synchronous>, transform_indices = @transform_1, window_bounds = array<i64: 640, 128>}, {pipeline_mode = #tpu.pipeline_mode<synchronous>, transform_indices = @transform_2, window_bounds = array<i64: 1, 128>}, {transform_indices = @transform_3, window_bounds = array<i64: 128, 128>}]} {
    %c0 = arith.constant 0 : index
    %c0_0 = arith.constant 0 : index
    %0 = vector.load %arg1[%c0, %c0_0] : memref<128x640xbf16, #tpu.memory_space<vmem>>, vector<128x640xbf16>
    %c0_1 = arith.constant 0 : index
    %c0_2 = arith.constant 0 : index
    %1 = vector.load %arg2[%c0_1, %c0_2] : memref<640x128xbf16, #tpu.memory_space<vmem>>, vector<640x128xbf16>
    %cst = arith.constant dense<0.000000e+00> : vector<128x128xf32>
    %2 = tpu.matmul %0, %1, %cst {dimension_numbers = #tpu.dot_dimension_numbers<[1], [0], [0], [1], [0, 0, 1, 1], [], []>} : vector<128x640xbf16>, vector<640x128xbf16>, vector<128x128xf32> -> vector<128x128xf32>
    %c0_3 = arith.constant 0 : index
    %c0_4 = arith.constant 0 : index
    %3 = vector.load %arg3[%c0_3, %c0_4] : memref<1x128xf32, #tpu.memory_space<vmem>>, vector<1x128xf32>
    %4 = vector.broadcast %3 : vector<1x128xf32> to vector<128x128xf32>
    %5 = arith.addf %2, %4 : vector<128x128xf32>
    %6 = arith.negf %5 : vector<128x128xf32>
    %7 = math.exp %6 : vector<128x128xf32>
    %cst_5 = arith.constant 1.000000e+00 : f32
    %8 = vector.broadcast %cst_5 : f32 to vector<128x128xf32>
    %9 = arith.addf %8, %7 : vector<128x128xf32>
    %10 = arith.divf %8, %9 : vector<128x128xf32>
    %c0_6 = arith.constant 0 : index
    %c0_7 = arith.constant 0 : index
    %11 = vector.load %arg4[%c0_6, %c0_7] : memref<128x128xf32, #tpu.memory_space<vmem>>, vector<128x128xf32>
    tpu.vector_store %arg4[%c0_6, %c0_7], %10 {strides = array<i32>} : memref<128x128xf32, #tpu.memory_space<vmem>>, vector<128x128xf32>,
    return
  }
  func.func @transform_0(%arg0: i32) -> (i32, i32) {
    %c0_i32 = arith.constant 0 : i32
    %c0_i32_0 = arith.constant 0 : i32
    return %arg0, %c0_i32 : i32, i32
  }
  func.func @transform_1(%arg0: i32) -> (i32, i32) {
    %c0_i32 = arith.constant 0 : i32
    %c0_i32_0 = arith.constant 0 : i32
    %c0_i32_1 = arith.constant 0 : i32
    return %c0_i32, %c0_i32_0 : i32, i32
  }
  func.func @transform_2(%arg0: i32) -> (i32, i32) {
    %c0_i32 = arith.constant 0 : i32
    %c0_i32_0 = arith.constant 0 : i32
    %c0_i32_1 = arith.constant 0 : i32
    return %c0_i32, %c0_i32_0 : i32, i32
  }
  func.func @transform_3(%arg0: i32) -> (i32, i32) {
    %c0_i32 = arith.constant 0 : i32
    %c0_i32_0 = arith.constant 0 : i32
    return %arg0, %c0_i32 : i32, i32
  }
}

</mosaic_0001>

<llo_original>
// kernel: autoencoder_forward.4
$region0: #{autoencoder_forward.4}
  #allocation0 [shape = 'u32[]', space=smem, size = 0x4, offset = 0x4, fixed_abs, tag = 'smem constant byte address 0x4 - core index']
  #allocation1 [shape = 'u32[72,128]{1,0:T(1,128)}', space=vmem, size = 0x9000, scoped, tag = 'internal scratch']
  %s0 = inlined_call_operand.vmem [shape: bf16[128,128], index: 0, kind: input, shape index: {}]
  %s1 = inlined_call_operand.vmem [shape: bf16[128,128], index: 1, kind: input, shape index: {}]
  %s2 = inlined_call_operand.vmem [shape: f32[1,128], index: 2, kind: input, shape index: {}]
  %s3 = inlined_call_operand.vmem [shape: f32[128,128], index: 3, kind: output, shape index: {}]
  %s4 = sld [smem:[#allocation0]]
  $region22: #{autoencoder_forward.4} parent=0
    _
  %s6 = ssub.s32 1, %s4
  %s7 = scalar_select 0, %s6, %s4
  // Predicated region
  $region2: #{autoencoder_forward.4} parent=0 // pred_check
    _
  $region3: #{autoencoder_forward.4} parent=0 // pred_check_branch
    %9 = sbr.rel (0) target = $region5
  $region4: #{autoencoder_forward.4} parent=0 // pred_region
    _
  $region5: #{autoencoder_forward.4} parent=0 // pred_fallthru
    _
  // Predicated region
  $region6: #{autoencoder_forward.4} parent=0 // pred_check
    _
  $region7: #{autoencoder_forward.4} parent=0 // pred_check_branch
    %11 = sbr.rel (0) target = $region9
  $region8: #{autoencoder_forward.4} parent=0 // pred_region
    _
  $region9: #{autoencoder_forward.4} parent=0 // pred_fallthru
    _
  // Predicated region
  $region10: #{autoencoder_forward.4} parent=0 // pred_check
    _
  $region11: #{autoencoder_forward.4} parent=0 // pred_check_branch
    %13 = sbr.rel (0) target = $region13
  $region12: #{autoencoder_forward.4} parent=0 // pred_region
    _
  $region13: #{autoencoder_forward.4} parent=0 // pred_fallthru
    _
  %v14 = vld [vmem:[%s0] sm:$0xf]
  %v15 = vld [vmem:[%s0 + $0x4] sm:$0xf]
  %v16 = vld [vmem:[%s0 + $0x8] sm:$0xf]
  %v17 = vld [vmem:[%s0 + $0xc] sm:$0xf]
  %v18 = vld [vmem:[%s0 + $0x10] sm:$0xf]
  %v19 = vld [vmem:[%s0 + $0x14] sm:$0xf]
  %v20 = vld [vmem:[%s0 + $0x18] sm:$0xf]
  %v21 = vld [vmem:[%s0 + $0x1c] sm:$0xf]
  %v22 = vld [vmem:[%s0 + $0x20] sm:$0xf]
  %v23 = vld [vmem:[%s0 + $0x24] sm:$0xf]
  %v24 = vld [vmem:[%s0 + $0x28] sm:$0xf]
  %v25 = vld [vmem:[%s0 + $0x2c] sm:$0xf]
  %v26 = vld [vmem:[%s0 + $0x30] sm:$0xf]
  %v27 = vld [vmem:[%s0 + $0x34] sm:$0xf]
  %v28 = vld [vmem:[%s0 + $0x38] sm:$0xf]
  %v29 = vld [vmem:[%s0 + $0x3c] sm:$0xf]
  %v30 = vld [vmem:[%s1] sm:$0xf]
  %v31 = vld [vmem:[%s1 + $0x4] sm:$0xf]
  %v32 = vld [vmem:[%s1 + $0x8] sm:$0xf]
  %v33 = vld [vmem:[%s1 + $0xc] sm:$0xf]
  %v34 = vld [vmem:[%s1 + $0x10] sm:$0xf]
  %v35 = vld [vmem:[%s1 + $0x14] sm:$0xf]
  %v36 = vld [vmem:[%s1 + $0x18] sm:$0xf]
  %v37 = vld [vmem:[%s1 + $0x1c] sm:$0xf]
  %v38 = vld [vmem:[%s1 + $0x20] sm:$0xf]
  %v39 = vld [vmem:[%s1 + $0x24] sm:$0xf]
  %v40 = vld [vmem:[%s1 + $0x28] sm:$0xf]
  %v41 = vld [vmem:[%s1 + $0x2c] sm:$0xf]
  %v42 = vld [vmem:[%s1 + $0x30] sm:$0xf]
  %v43 = vld [vmem:[%s1 + $0x34] sm:$0xf]
  %v44 = vld [vmem:[%s1 + $0x38] sm:$0xf]
  %v45 = vld [vmem:[%s1 + $0x3c] sm:$0xf]
  %v46 = vld [vmem:[%s2] sm:$0x1]
  %v48 = vperm.slane %v46, 0
  %v66 = vunpack.c.l.b16 %v14
  %v67 = vunpack.c.l.b16 %v15
  %v68 = vunpack.c.l.b16 %v16
  %v69 = vunpack.c.l.b16 %v17
  %v70 = vunpack.c.l.b16 %v18
  %v71 = vunpack.c.l.b16 %v19
  %v72 = vunpack.c.l.b16 %v20
  %v73 = vunpack.c.l.b16 %v21
  %v74 = vunpack.c.l.b16 %v22
  %v75 = vunpack.c.l.b16 %v23
  %v76 = vunpack.c.l.b16 %v24
  %v77 = vunpack.c.l.b16 %v25
  %v78 = vunpack.c.l.b16 %v26
  %v79 = vunpack.c.l.b16 %v27
  %v80 = vunpack.c.l.b16 %v28
  %v81 = vunpack.c.l.b16 %v29
  %v82 = vpack.c.b16 %v67, %v66
  %v83 = vpack.c.b16 %v69, %v68
  %v84 = vpack.c.b16 %v71, %v70
  %v85 = vpack.c.b16 %v73, %v72
  %v86 = vpack.c.b16 %v75, %v74
  %v87 = vpack.c.b16 %v77, %v76
  %v88 = vpack.c.b16 %v79, %v78
  %v89 = vpack.c.b16 %v81, %v80
  %v114 = vunpack.c.l.b16 %v30
  %v115 = vunpack.c.l.b16 %v31
  %v116 = vunpack.c.l.b16 %v32
  %v117 = vunpack.c.l.b16 %v33
  %v118 = vunpack.c.l.b16 %v34
  %v119 = vunpack.c.l.b16 %v35
  %v120 = vunpack.c.l.b16 %v36
  %v121 = vunpack.c.l.b16 %v37
  %v122 = vunpack.c.l.b16 %v38
  %v123 = vunpack.c.l.b16 %v39
  %v124 = vunpack.c.l.b16 %v40
  %v125 = vunpack.c.l.b16 %v41
  %v126 = vunpack.c.l.b16 %v42
  %v127 = vunpack.c.l.b16 %v43
  %v128 = vunpack.c.l.b16 %v44
  %v129 = vunpack.c.l.b16 %v45
  %v130 = vpack.c.b16 %v115, %v114
  %v131 = vpack.c.b16 %v117, %v116
  %v132 = vpack.c.b16 %v119, %v118
  %v133 = vpack.c.b16 %v121, %v120
  %v134 = vpack.c.b16 %v123, %v122
  %v135 = vpack.c.b16 %v125, %v124
  %v136 = vpack.c.b16 %v127, %v126
  %v137 = vpack.c.b16 %v129, %v128
  %146 = vmatpush.bf16.msra.mxu0 %v137
  %147 = vmatpush.bf16.msra.mxu0 %v136
  %148 = vmatpush.bf16.msra.mxu0 %v135
  %149 = vmatpush.bf16.msra.mxu0 %v134
  %150 = vmatpush.bf16.msra.mxu0 %v133
  %151 = vmatpush.bf16.msra.mxu0 %v132
  %152 = vmatpush.bf16.msra.mxu0 %v131
  %153 = vmatpush.bf16.msra.mxu0 %v130
  %154 = vmatmul.bf16.gmra.mxu0 %v82
  %v155 = vpop.f32.mrf.mxu0
  %v156 = vadd.f32 %v48, %v155
  %v157 = vpop.f32.mrf.mxu0
  %v158 = vadd.f32 %v48, %v157
  %159 = vmatmul.bf16.gmra.mxu0 %v83
  %v160 = vpop.f32.mrf.mxu0
  %v161 = vadd.f32 %v48, %v160
  %v162 = vpop.f32.mrf.mxu0
  %v163 = vadd.f32 %v48, %v162
  %164 = vmatmul.bf16.gmra.mxu0 %v84
  %v165 = vpop.f32.mrf.mxu0
  %v166 = vadd.f32 %v48, %v165
  %v167 = vpop.f32.mrf.mxu0
  %v168 = vadd.f32 %v48, %v167
  %169 = vmatmul.bf16.gmra.mxu0 %v85
  %v170 = vpop.f32.mrf.mxu0
  %v171 = vadd.f32 %v48, %v170
  %v172 = vpop.f32.mrf.mxu0
  %v173 = vadd.f32 %v48, %v172
  %174 = vmatmul.bf16.gmra.mxu0 %v86
  %v175 = vpop.f32.mrf.mxu0
  %v176 = vadd.f32 %v48, %v175
  %v177 = vpop.f32.mrf.mxu0
  %v178 = vadd.f32 %v48, %v177
  %179 = vmatmul.bf16.gmra.mxu0 %v87
  %v180 = vpop.f32.mrf.mxu0
  %v181 = vadd.f32 %v48, %v180
  %v182 = vpop.f32.mrf.mxu0
  %v183 = vadd.f32 %v48, %v182
  %184 = vmatmul.bf16.gmra.mxu0 %v88
  %v185 = vpop.f32.mrf.mxu0
  %v186 = vadd.f32 %v48, %v185
  %v187 = vpop.f32.mrf.mxu0
  %v188 = vadd.f32 %v48, %v187
  %189 = vmatmul.bf16.gmra.mxu0 %v89
  %v190 = vpop.f32.mrf.mxu0
  %v191 = vadd.f32 %v48, %v190
  %v192 = vpop.f32.mrf.mxu0
  %v193 = vadd.f32 %v48, %v192
  %194 = vdwg.mxu0
  %v195 = vmax.f32 %v156, 0.0
  %v196 = vmax.f32 %v158, 0.0
  %v197 = vmax.f32 %v161, 0.0
  %v198 = vmax.f32 %v163, 0.0
  %v199 = vmax.f32 %v166, 0.0
  %v200 = vmax.f32 %v168, 0.0
  %v201 = vmax.f32 %v171, 0.0
  %v202 = vmax.f32 %v173, 0.0
  %v203 = vmax.f32 %v176, 0.0
  %v204 = vmax.f32 %v178, 0.0
  %v205 = vmax.f32 %v181, 0.0
  %v206 = vmax.f32 %v183, 0.0
  %v207 = vmax.f32 %v186, 0.0
  %v208 = vmax.f32 %v188, 0.0
  %v209 = vmax.f32 %v191, 0.0
  %v210 = vmax.f32 %v193, 0.0
  %211 = vst [vmem:[%s3] sm:$0xff] %v195
  %212 = vst [vmem:[%s3 + $0x8] sm:$0xff] %v196
  %213 = vst [vmem:[%s3 + $0x10] sm:$0xff] %v197
  %214 = vst [vmem:[%s3 + $0x18] sm:$0xff] %v198
  %215 = vst [vmem:[%s3 + $0x20] sm:$0xff] %v199
  %216 = vst [vmem:[%s3 + $0x28] sm:$0xff] %v200
  %217 = vst [vmem:[%s3 + $0x30] sm:$0xff] %v201
  %218 = vst [vmem:[%s3 + $0x38] sm:$0xff] %v202
  %219 = vst [vmem:[%s3 + $0x40] sm:$0xff] %v203
  %220 = vst [vmem:[%s3 + $0x48] sm:$0xff] %v204
  %221 = vst [vmem:[%s3 + $0x50] sm:$0xff] %v205
  %222 = vst [vmem:[%s3 + $0x58] sm:$0xff] %v206
  %223 = vst [vmem:[%s3 + $0x60] sm:$0xff] %v207
  %224 = vst [vmem:[%s3 + $0x68] sm:$0xff] %v208
  %225 = vst [vmem:[%s3 + $0x70] sm:$0xff] %v209
  %226 = vst [vmem:[%s3 + $0x78] sm:$0xff] %v210
  // Predicated region
  $region14: #{autoencoder_forward.4} parent=0 // pred_check
    _
  $region15: #{autoencoder_forward.4} parent=0 // pred_check_branch
    %228 = sbr.rel (0) target = $region17
  $region16: #{autoencoder_forward.4} parent=0 // pred_region
    _
  $region17: #{autoencoder_forward.4} parent=0 // pred_fallthru
    _
  // Predicated region
  $region18: #{autoencoder_forward.4} parent=0 // pred_check
    _
  $region19: #{autoencoder_forward.4} parent=0 // pred_check_branch
    %230 = sbr.rel (0) target = $region21
  $region20: #{autoencoder_forward.4} parent=0 // pred_region
    _
  $region21: #{autoencoder_forward.4} parent=0 // pred_fallthru
    _

// kernel: tile.13
$region0: #{tile.13}
  #allocation0 [shape = 's32[1]{0}', space=sflag, size = 0x4, scoped, tag = 'scoped memory for tile.13']
  %s0 = inlined_call_operand.vmem [shape: f32[64], index: 0, kind: input, shape index: {}]
  %s1 = inlined_call_operand.vmem [shape: f32[4,64], index: 1, kind: output, shape index: {}]
  // Predicated region
  $region2: #{tile.13} parent=0 // pred_check
    _
  $region3: #{tile.13} parent=0 // pred_check_branch
    %3 = sbr.rel (0) target = $region5
  $region4: #{tile.13} parent=0 // pred_region
    _
  $region5: #{tile.13} parent=0 // pred_fallthru
    _
  %v4 = vld [vmem:[%s0] ss:$0 sm:$0xff]
  %5 = vst [vmem:[%s1] sm:$0xf] %v4

// kernel: autoencoder_forward.5
$region0: #{autoencoder_forward.5}
  #allocation0 [shape = 'u32[]', space=smem, size = 0x4, offset = 0x4, fixed_abs, tag = 'smem constant byte address 0x4 - core index']
  #allocation1 [shape = 'u32[72,128]{1,0:T(1,128)}', space=vmem, size = 0x9000, scoped, tag = 'internal scratch']
  %s0 = inlined_call_operand.vmem [shape: bf16[32,1024], index: 0, kind: input, shape index: {}]
  %s1 = inlined_call_operand.vmem [shape: bf16[1024,128], index: 1, kind: input, shape index: {}]
  %s2 = inlined_call_operand.vmem [shape: f32[1,128], index: 2, kind: input, shape index: {}]
  %s3 = inlined_call_operand.vmem [shape: f32[32,128], index: 3, kind: output, shape index: {}]
  %s4 = sld [smem:[#allocation0]]
  $region22: #{autoencoder_forward.5} parent=0
    _
  %s6 = ssub.s32 1, %s4
  %s7 = scalar_select 0, %s6, %s4
  // Predicated region
  $region2: #{autoencoder_forward.5} parent=0 // pred_check
    _
  $region3: #{autoencoder_forward.5} parent=0 // pred_check_branch
    %9 = sbr.rel (0) target = $region5
  $region4: #{autoencoder_forward.5} parent=0 // pred_region
    _
  $region5: #{autoencoder_forward.5} parent=0 // pred_fallthru
    _
  // Predicated region
  $region6: #{autoencoder_forward.5} parent=0 // pred_check
    _
  $region7: #{autoencoder_forward.5} parent=0 // pred_check_branch
    %11 = sbr.rel (0) target = $region9
  $region8: #{autoencoder_forward.5} parent=0 // pred_region
    _
  $region9: #{autoencoder_forward.5} parent=0 // pred_fallthru
    _
  // Predicated region
  $region10: #{autoencoder_forward.5} parent=0 // pred_check
    _
  $region11: #{autoencoder_forward.5} parent=0 // pred_check_branch
    %13 = sbr.rel (0) target = $region13
  $region12: #{autoencoder_forward.5} parent=0 // pred_region
    _
  $region13: #{autoencoder_forward.5} parent=0 // pred_fallthru
    _
  %v14 = vld [vmem:[%s0] sm:$0xff]
  %v15 = vld [vmem:[%s0 + $0x8] sm:$0xff]
  %v16 = vld [vmem:[%s0 + $0x10] sm:$0xff]
  %v17 = vld [vmem:[%s0 + $0x18] sm:$0xff]
  %v18 = vld [vmem:[%s0 + $0x20] sm:$0xff]
  %v19 = vld [vmem:[%s0 + $0x28] sm:$0xff]
  %v20 = vld [vmem:[%s0 + $0x30] sm:$0xff]
  %v21 = vld [vmem:[%s0 + $0x38] sm:$0xff]
  %v22 = vld [vmem:[%s0 + $0x40] sm:$0xff]
  %v23 = vld [vmem:[%s0 + $0x48] sm:$0xff]
  %v24 = vld [vmem:[%s0 + $0x50] sm:$0xff]
  %v25 = vld [vmem:[%s0 + $0x58] sm:$0xff]
  %v26 = vld [vmem:[%s0 + $0x60] sm:$0xff]
  %v27 = vld [vmem:[%s0 + $0x68] sm:$0xff]
  %v28 = vld [vmem:[%s0 + $0x70] sm:$0xff]
  %v29 = vld [vmem:[%s0 + $0x78] sm:$0xff]
  %v30 = vld [vmem:[%s1] sm:$0xf]
  %v31 = vld [vmem:[%s1 + $0x4] sm:$0xf]
  %v32 = vld [vmem:[%s1 + $0x8] sm:$0xf]
  %v33 = vld [vmem:[%s1 + $0xc] sm:$0xf]
  %v34 = vld [vmem:[%s1 + $0x10] sm:$0xf]
  %v35 = vld [vmem:[%s1 + $0x14] sm:$0xf]
  %v36 = vld [vmem:[%s1 + $0x18] sm:$0xf]
  %v37 = vld [vmem:[%s1 + $0x1c] sm:$0xf]
  %v38 = vld [vmem:[%s1 + $0x20] sm:$0xf]
  %v39 = vld [vmem:[%s1 + $0x24] sm:$0xf]
  %v40 = vld [vmem:[%s1 + $0x28] sm:$0xf]
  %v41 = vld [vmem:[%s1 + $0x2c] sm:$0xf]
  %v42 = vld [vmem:[%s1 + $0x30] sm:$0xf]
  %v43 = vld [vmem:[%s1 + $0x34] sm:$0xf]
  %v44 = vld [vmem:[%s1 + $0x38] sm:$0xf]
  %v45 = vld [vmem:[%s1 + $0x3c] sm:$0xf]
  %v46 = vld [vmem:[%s1 + $0x40] sm:$0xf]
  %v47 = vld [vmem:[%s1 + $0x44] sm:$0xf]
  %v48 = vld [vmem:[%s1 + $0x48] sm:$0xf]
  %v49 = vld [vmem:[%s1 + $0x4c] sm:$0xf]
  %v50 = vld [vmem:[%s1 + $0x50] sm:$0xf]
  %v51 = vld [vmem:[%s1 + $0x54] sm:$0xf]
  %v52 = vld [vmem:[%s1 + $0x58] sm:$0xf]
  %v53 = vld [vmem:[%s1 + $0x5c] sm:$0xf]
  %v54 = vld [vmem:[%s1 + $0x60] sm:$0xf]
  %v55 = vld [vmem:[%s1 + $0x64] sm:$0xf]
  %v56 = vld [vmem:[%s1 + $0x68] sm:$0xf]
  %v57 = vld [vmem:[%s1 + $0x6c] sm:$0xf]
  %v58 = vld [vmem:[%s1 + $0x70] sm:$0xf]
  %v59 = vld [vmem:[%s1 + $0x74] sm:$0xf]
  %v60 = vld [vmem:[%s1 + $0x78] sm:$0xf]
  %v61 = vld [vmem:[%s1 + $0x7c] sm:$0xf]
  %v62 = vld [vmem:[%s1 + $0x80] sm:$0xf]
  %v63 = vld [vmem:[%s1 + $0x84] sm:$0xf]
  %v64 = vld [vmem:[%s1 + $0x88] sm:$0xf]
  %v65 = vld [vmem:[%s1 + $0x8c] sm:$0xf]
  %v66 = vld [vmem:[%s1 + $0x90] sm:$0xf]
  %v67 = vld [vmem:[%s1 + $0x94] sm:$0xf]
  %v68 = vld [vmem:[%s1 + $0x98] sm:$0xf]
  %v69 = vld [vmem:[%s1 + $0x9c] sm:$0xf]
  %v70 = vld [vmem:[%s1 + $0xa0] sm:$0xf]
  %v71 = vld [vmem:[%s1 + $0xa4] sm:$0xf]
  %v72 = vld [vmem:[%s1 + $0xa8] sm:$0xf]
  %v73 = vld [vmem:[%s1 + $0xac] sm:$0xf]
  %v74 = vld [vmem:[%s1 + $0xb0] sm:$0xf]
  %v75 = vld [vmem:[%s1 + $0xb4] sm:$0xf]
  %v76 = vld [vmem:[%s1 + $0xb8] sm:$0xf]
  %v77 = vld [vmem:[%s1 + $0xbc] sm:$0xf]
  %v78 = vld [vmem:[%s1 + $0xc0] sm:$0xf]
  %v79 = vld [vmem:[%s1 + $0xc4] sm:$0xf]
  %v80 = vld [vmem:[%s1 + $0xc8] sm:$0xf]
  %v81 = vld [vmem:[%s1 + $0xcc] sm:$0xf]
  %v82 = vld [vmem:[%s1 + $0xd0] sm:$0xf]
  %v83 = vld [vmem:[%s1 + $0xd4] sm:$0xf]
  %v84 = vld [vmem:[%s1 + $0xd8] sm:$0xf]
  %v85 = vld [vmem:[%s1 + $0xdc] sm:$0xf]
  %v86 = vld [vmem:[%s1 + $0xe0] sm:$0xf]
  %v87 = vld [vmem:[%s1 + $0xe4] sm:$0xf]
  %v88 = vld [vmem:[%s1 + $0xe8] sm:$0xf]
  %v89 = vld [vmem:[%s1 + $0xec] sm:$0xf]
  %v90 = vld [vmem:[%s1 + $0xf0] sm:$0xf]
  %v91 = vld [vmem:[%s1 + $0xf4] sm:$0xf]
  %v92 = vld [vmem:[%s1 + $0xf8] sm:$0xf]
  %v93 = vld [vmem:[%s1 + $0xfc] sm:$0xf]
  %v94 = vld [vmem:[%s1 + $0x100] sm:$0xf]
  %v95 = vld [vmem:[%s1 + $0x104] sm:$0xf]
  %v96 = vld [vmem:[%s1 + $0x108] sm:$0xf]
  %v97 = vld [vmem:[%s1 + $0x10c] sm:$0xf]
  %v98 = vld [vmem:[%s1 + $0x110] sm:$0xf]
  %v99 = vld [vmem:[%s1 + $0x114] sm:$0xf]
  %v100 = vld [vmem:[%s1 + $0x118] sm:$0xf]
  %v101 = vld [vmem:[%s1 + $0x11c] sm:$0xf]
  %v102 = vld [vmem:[%s1 + $0x120] sm:$0xf]
  %v103 = vld [vmem:[%s1 + $0x124] sm:$0xf]
  %v104 = vld [vmem:[%s1 + $0x128] sm:$0xf]
  %v105 = vld [vmem:[%s1 + $0x12c] sm:$0xf]
  %v106 = vld [vmem:[%s1 + $0x130] sm:$0xf]
  %v107 = vld [vmem:[%s1 + $0x134] sm:$0xf]
  %v108 = vld [vmem:[%s1 + $0x138] sm:$0xf]
  %v109 = vld [vmem:[%s1 + $0x13c] sm:$0xf]
  %v110 = vld [vmem:[%s1 + $0x140] sm:$0xf]
  %v111 = vld [vmem:[%s1 + $0x144] sm:$0xf]
  %v112 = vld [vmem:[%s1 + $0x148] sm:$0xf]
  %v113 = vld [vmem:[%s1 + $0x14c] sm:$0xf]
  %v114 = vld [vmem:[%s1 + $0x150] sm:$0xf]
  %v115 = vld [vmem:[%s1 + $0x154] sm:$0xf]
  %v116 = vld [vmem:[%s1 + $0x158] sm:$0xf]
  %v117 = vld [vmem:[%s1 + $0x15c] sm:$0xf]
  %v118 = vld [vmem:[%s1 + $0x160] sm:$0xf]
  %v119 = vld [vmem:[%s1 + $0x164] sm:$0xf]
  %v120 = vld [vmem:[%s1 + $0x168] sm:$0xf]
  %v121 = vld [vmem:[%s1 + $0x16c] sm:$0xf]
  %v122 = vld [vmem:[%s1 + $0x170] sm:$0xf]
  %v123 = vld [vmem:[%s1 + $0x174] sm:$0xf]
  %v124 = vld [vmem:[%s1 + $0x178] sm:$0xf]
  %v125 = vld [vmem:[%s1 + $0x17c] sm:$0xf]
  %v126 = vld [vmem:[%s1 + $0x180] sm:$0xf]
  %v127 = vld [vmem:[%s1 + $0x184] sm:$0xf]
  %v128 = vld [vmem:[%s1 + $0x188] sm:$0xf]
  %v129 = vld [vmem:[%s1 + $0x18c] sm:$0xf]
  %v130 = vld [vmem:[%s1 + $0x190] sm:$0xf]
  %v131 = vld [vmem:[%s1 + $0x194] sm:$0xf]
  %v132 = vld [vmem:[%s1 + $0x198] sm:$0xf]
  %v133 = vld [vmem:[%s1 + $0x19c] sm:$0xf]
  %v134 = vld [vmem:[%s1 + $0x1a0] sm:$0xf]
  %v135 = vld [vmem:[%s1 + $0x1a4] sm:$0xf]
  %v136 = vld [vmem:[%s1 + $0x1a8] sm:$0xf]
  %v137 = vld [vmem:[%s1 + $0x1ac] sm:$0xf]
  %v138 = vld [vmem:[%s1 + $0x1b0] sm:$0xf]
  %v139 = vld [vmem:[%s1 + $0x1b4] sm:$0xf]
  %v140 = vld [vmem:[%s1 + $0x1b8] sm:$0xf]
  %v141 = vld [vmem:[%s1 + $0x1bc] sm:$0xf]
  %v142 = vld [vmem:[%s1 + $0x1c0] sm:$0xf]
  %v143 = vld [vmem:[%s1 + $0x1c4] sm:$0xf]
  %v144 = vld [vmem:[%s1 + $0x1c8] sm:$0xf]
  %v145 = vld [vmem:[%s1 + $0x1cc] sm:$0xf]
  %v146 = vld [vmem:[%s1 + $0x1d0] sm:$0xf]
  %v147 = vld [vmem:[%s1 + $0x1d4] sm:$0xf]
  %v148 = vld [vmem:[%s1 + $0x1d8] sm:$0xf]
  %v149 = vld [vmem:[%s1 + $0x1dc] sm:$0xf]
  %v150 = vld [vmem:[%s1 + $0x1e0] sm:$0xf]
  %v151 = vld [vmem:[%s1 + $0x1e4] sm:$0xf]
  %v152 = vld [vmem:[%s1 + $0x1e8] sm:$0xf]
  %v153 = vld [vmem:[%s1 + $0x1ec] sm:$0xf]
  %v154 = vld [vmem:[%s1 + $0x1f0] sm:$0xf]
  %v155 = vld [vmem:[%s1 + $0x1f4] sm:$0xf]
  %v156 = vld [vmem:[%s1 + $0x1f8] sm:$0xf]
  %v157 = vld [vmem:[%s1 + $0x1fc] sm:$0xf]
  %v158 = vld [vmem:[%s2] sm:$0x1]
  %v160 = vperm.slane %v158, 0
  %v178 = vunpack.c.l.b16 %v14
  %v179 = vunpack.c.h.b16 %v14
  %v180 = vunpack.c.l.b16 %v15
  %v181 = vunpack.c.h.b16 %v15
  %v182 = vunpack.c.l.b16 %v16
  %v183 = vunpack.c.h.b16 %v16
  %v184 = vunpack.c.l.b16 %v17
  %v185 = vunpack.c.h.b16 %v17
  %v186 = vunpack.c.l.b16 %v18
  %v187 = vunpack.c.h.b16 %v18
  %v188 = vunpack.c.l.b16 %v19
  %v189 = vunpack.c.h.b16 %v19
  %v190 = vunpack.c.l.b16 %v20
  %v191 = vunpack.c.h.b16 %v20
  %v192 = vunpack.c.l.b16 %v21
  %v193 = vunpack.c.h.b16 %v21
  %v194 = vunpack.c.l.b16 %v22
  %v195 = vunpack.c.h.b16 %v22
  %v196 = vunpack.c.l.b16 %v23
  %v197 = vunpack.c.h.b16 %v23
  %v198 = vunpack.c.l.b16 %v24
  %v199 = vunpack.c.h.b16 %v24
  %v200 = vunpack.c.l.b16 %v25
  %v201 = vunpack.c.h.b16 %v25
  %v202 = vunpack.c.l.b16 %v26
  %v203 = vunpack.c.h.b16 %v26
  %v204 = vunpack.c.l.b16 %v27
  %v205 = vunpack.c.h.b16 %v27
  %v206 = vunpack.c.l.b16 %v28
  %v207 = vunpack.c.h.b16 %v28
  %v208 = vunpack.c.l.b16 %v29
  %v209 = vunpack.c.h.b16 %v29
  %v210 = vpack.c.b16 %v186, %v178
  %v211 = vpack.c.b16 %v187, %v179
  %v212 = vpack.c.b16 %v188, %v180
  %v213 = vpack.c.b16 %v189, %v181
  %v214 = vpack.c.b16 %v190, %v182
  %v215 = vpack.c.b16 %v191, %v183
  %v216 = vpack.c.b16 %v192, %v184
  %v217 = vpack.c.b16 %v193, %v185
  %v218 = vpack.c.b16 %v202, %v194
  %v219 = vpack.c.b16 %v203, %v195
  %v220 = vpack.c.b16 %v204, %v196
  %v221 = vpack.c.b16 %v205, %v197
  %v222 = vpack.c.b16 %v206, %v198
  %v223 = vpack.c.b16 %v207, %v199
  %v224 = vpack.c.b16 %v208, %v200
  %v225 = vpack.c.b16 %v209, %v201
  %v370 = vunpack.c.l.b16 %v30
  %v371 = vunpack.c.l.b16 %v31
  %v372 = vunpack.c.l.b16 %v32
  %v373 = vunpack.c.l.b16 %v33
  %v374 = vunpack.c.l.b16 %v34
  %v375 = vunpack.c.l.b16 %v35
  %v376 = vunpack.c.l.b16 %v36
  %v377 = vunpack.c.l.b16 %v37
  %v378 = vunpack.c.l.b16 %v38
  %v379 = vunpack.c.l.b16 %v39
  %v380 = vunpack.c.l.b16 %v40
  %v381 = vunpack.c.l.b16 %v41
  %v382 = vunpack.c.l.b16 %v42
  %v383 = vunpack.c.l.b16 %v43
  %v384 = vunpack.c.l.b16 %v44
  %v385 = vunpack.c.l.b16 %v45
  %v386 = vunpack.c.l.b16 %v46
  %v387 = vunpack.c.l.b16 %v47
  %v388 = vunpack.c.l.b16 %v48
  %v389 = vunpack.c.l.b16 %v49
  %v390 = vunpack.c.l.b16 %v50
  %v391 = vunpack.c.l.b16 %v51
  %v392 = vunpack.c.l.b16 %v52
  %v393 = vunpack.c.l.b16 %v53
  %v394 = vunpack.c.l.b16 %v54
  %v395 = vunpack.c.l.b16 %v55
  %v396 = vunpack.c.l.b16 %v56
  %v397 = vunpack.c.l.b16 %v57
  %v398 = vunpack.c.l.b16 %v58
  %v399 = vunpack.c.l.b16 %v59
  %v400 = vunpack.c.l.b16 %v60
  %v401 = vunpack.c.l.b16 %v61
  %v402 = vunpack.c.l.b16 %v62
  %v403 = vunpack.c.l.b16 %v63
  %v404 = vunpack.c.l.b16 %v64
  %v405 = vunpack.c.l.b16 %v65
  %v406 = vunpack.c.l.b16 %v66
  %v407 = vunpack.c.l.b16 %v67
  %v408 = vunpack.c.l.b16 %v68
  %v409 = vunpack.c.l.b16 %v69
  %v410 = vunpack.c.l.b16 %v70
  %v411 = vunpack.c.l.b16 %v71
  %v412 = vunpack.c.l.b16 %v72
  %v413 = vunpack.c.l.b16 %v73
  %v414 = vunpack.c.l.b16 %v74
  %v415 = vunpack.c.l.b16 %v75
  %v416 = vunpack.c.l.b16 %v76
  %v417 = vunpack.c.l.b16 %v77
  %v418 = vunpack.c.l.b16 %v78
  %v419 = vunpack.c.l.b16 %v79
  %v420 = vunpack.c.l.b16 %v80
  %v421 = vunpack.c.l.b16 %v81
  %v422 = vunpack.c.l.b16 %v82
  %v423 = vunpack.c.l.b16 %v83
  %v424 = vunpack.c.l.b16 %v84
  %v425 = vunpack.c.l.b16 %v85
  %v426 = vunpack.c.l.b16 %v86
  %v427 = vunpack.c.l.b16 %v87
  %v428 = vunpack.c.l.b16 %v88
  %v429 = vunpack.c.l.b16 %v89
  %v430 = vunpack.c.l.b16 %v90
  %v431 = vunpack.c.l.b16 %v91
  %v432 = vunpack.c.l.b16 %v92
  %v433 = vunpack.c.l.b16 %v93
  %v434 = vunpack.c.l.b16 %v94
  %v435 = vunpack.c.l.b16 %v95
  %v436 = vunpack.c.l.b16 %v96
  %v437 = vunpack.c.l.b16 %v97
  %v438 = vunpack.c.l.b16 %v98
  %v439 = vunpack.c.l.b16 %v99
  %v440 = vunpack.c.l.b16 %v100
  %v441 = vunpack.c.l.b16 %v101
  %v442 = vunpack.c.l.b16 %v102
  %v443 = vunpack.c.l.b16 %v103
  %v444 = vunpack.c.l.b16 %v104
  %v445 = vunpack.c.l.b16 %v105
  %v446 = vunpack.c.l.b16 %v106
  %v447 = vunpack.c.l.b16 %v107
  %v448 = vunpack.c.l.b16 %v108
  %v449 = vunpack.c.l.b16 %v109
  %v450 = vunpack.c.l.b16 %v110
  %v451 = vunpack.c.l.b16 %v111
  %v452 = vunpack.c.l.b16 %v112
  %v453 = vunpack.c.l.b16 %v113
  %v454 = vunpack.c.l.b16 %v114
  %v455 = vunpack.c.l.b16 %v115
  %v456 = vunpack.c.l.b16 %v116
  %v457 = vunpack.c.l.b16 %v117
  %v458 = vunpack.c.l.b16 %v118
  %v459 = vunpack.c.l.b16 %v119
  %v460 = vunpack.c.l.b16 %v120
  %v461 = vunpack.c.l.b16 %v121
  %v462 = vunpack.c.l.b16 %v122
  %v463 = vunpack.c.l.b16 %v123
  %v464 = vunpack.c.l.b16 %v124
  %v465 = vunpack.c.l.b16 %v125
  %v466 = vunpack.c.l.b16 %v126
  %v467 = vunpack.c.l.b16 %v127
  %v468 = vunpack.c.l.b16 %v128
  %v469 = vunpack.c.l.b16 %v129
  %v470 = vunpack.c.l.b16 %v130
  %v471 = vunpack.c.l.b16 %v131
  %v472 = vunpack.c.l.b16 %v132
  %v473 = vunpack.c.l.b16 %v133
  %v474 = vunpack.c.l.b16 %v134
  %v475 = vunpack.c.l.b16 %v135
  %v476 = vunpack.c.l.b16 %v136
  %v477 = vunpack.c.l.b16 %v137
  %v478 = vunpack.c.l.b16 %v138
  %v479 = vunpack.c.l.b16 %v139
  %v480 = vunpack.c.l.b16 %v140
  %v481 = vunpack.c.l.b16 %v141
  %v482 = vunpack.c.l.b16 %v142
  %v483 = vunpack.c.l.b16 %v143
  %v484 = vunpack.c.l.b16 %v144
  %v485 = vunpack.c.l.b16 %v145
  %v486 = vunpack.c.l.b16 %v146
  %v487 = vunpack.c.l.b16 %v147
  %v488 = vunpack.c.l.b16 %v148
  %v489 = vunpack.c.l.b16 %v149
  %v490 = vunpack.c.l.b16 %v150
  %v491 = vunpack.c.l.b16 %v151
  %v492 = vunpack.c.l.b16 %v152
  %v493 = vunpack.c.l.b16 %v153
  %v494 = vunpack.c.l.b16 %v154
  %v495 = vunpack.c.l.b16 %v155
  %v496 = vunpack.c.l.b16 %v156
  %v497 = vunpack.c.l.b16 %v157
  %v498 = vpack.c.b16 %v371, %v370
  %v499 = vpack.c.b16 %v373, %v372
  %v500 = vpack.c.b16 %v375, %v374
  %v501 = vpack.c.b16 %v377, %v376
  %v502 = vpack.c.b16 %v379, %v378
  %v503 = vpack.c.b16 %v381, %v380
  %v504 = vpack.c.b16 %v383, %v382
  %v505 = vpack.c.b16 %v385, %v384
  %v506 = vpack.c.b16 %v387, %v386
  %v507 = vpack.c.b16 %v389, %v388
  %v508 = vpack.c.b16 %v391, %v390
  %v509 = vpack.c.b16 %v393, %v392
  %v510 = vpack.c.b16 %v395, %v394
  %v511 = vpack.c.b16 %v397, %v396
  %v512 = vpack.c.b16 %v399, %v398
  %v513 = vpack.c.b16 %v401, %v400
  %v514 = vpack.c.b16 %v403, %v402
  %v515 = vpack.c.b16 %v405, %v404
  %v516 = vpack.c.b16 %v407, %v406
  %v517 = vpack.c.b16 %v409, %v408
  %v518 = vpack.c.b16 %v411, %v410
  %v519 = vpack.c.b16 %v413, %v412
  %v520 = vpack.c.b16 %v415, %v414
  %v521 = vpack.c.b16 %v417, %v416
  %v522 = vpack.c.b16 %v419, %v418
  %v523 = vpack.c.b16 %v421, %v420
  %v524 = vpack.c.b16 %v423, %v422
  %v525 = vpack.c.b16 %v425, %v424
  %v526 = vpack.c.b16 %v427, %v426
  %v527 = vpack.c.b16 %v429, %v428
  %v528 = vpack.c.b16 %v431, %v430
  %v529 = vpack.c.b16 %v433, %v432
  %v530 = vpack.c.b16 %v435, %v434
  %v531 = vpack.c.b16 %v437, %v436
  %v532 = vpack.c.b16 %v439, %v438
  %v533 = vpack.c.b16 %v441, %v440
  %v534 = vpack.c.b16 %v443, %v442
  %v535 = vpack.c.b16 %v445, %v444
  %v536 = vpack.c.b16 %v447, %v446
  %v537 = vpack.c.b16 %v449, %v448
  %v538 = vpack.c.b16 %v451, %v450
  %v539 = vpack.c.b16 %v453, %v452
  %v540 = vpack.c.b16 %v455, %v454
  %v541 = vpack.c.b16 %v457, %v456
  %v542 = vpack.c.b16 %v459, %v458
  %v543 = vpack.c.b16 %v461, %v460
  %v544 = vpack.c.b16 %v463, %v462
  %v545 = vpack.c.b16 %v465, %v464
  %v546 = vpack.c.b16 %v467, %v466
  %v547 = vpack.c.b16 %v469, %v468
  %v548 = vpack.c.b16 %v471, %v470
  %v549 = vpack.c.b16 %v473, %v472
  %v550 = vpack.c.b16 %v475, %v474
  %v551 = vpack.c.b16 %v477, %v476
  %v552 = vpack.c.b16 %v479, %v478
  %v553 = vpack.c.b16 %v481, %v480
  %v554 = vpack.c.b16 %v483, %v482
  %v555 = vpack.c.b16 %v485, %v484
  %v556 = vpack.c.b16 %v487, %v486
  %v557 = vpack.c.b16 %v489, %v488
  %v558 = vpack.c.b16 %v491, %v490
  %v559 = vpack.c.b16 %v493, %v492
  %v560 = vpack.c.b16 %v495, %v494
  %v561 = vpack.c.b16 %v497, %v496
  %626 = vmatpush.bf16.msra.mxu0 %v505
  %627 = vmatpush.bf16.msra.mxu0 %v504
  %628 = vmatpush.bf16.msra.mxu0 %v503
  %629 = vmatpush.bf16.msra.mxu0 %v502
  %630 = vmatpush.bf16.msra.mxu0 %v501
  %631 = vmatpush.bf16.msra.mxu0 %v500
  %632 = vmatpush.bf16.msra.mxu0 %v499
  %633 = vmatpush.bf16.msra.mxu0 %v498
  %634 = vmatmul.bf16.gmra.mxu0 %v210
  %v635 = vpop.f32.mrf.mxu0
  %v636 = vadd.f32 %v160, %v635
  %v637 = vpop.f32.mrf.mxu0
  %v638 = vadd.f32 %v160, %v637
  %639 = vmatmul.bf16.gmra.mxu0 %v218
  %v640 = vpop.f32.mrf.mxu0
  %v641 = vadd.f32 %v160, %v640
  %v642 = vpop.f32.mrf.mxu0
  %v643 = vadd.f32 %v160, %v642
  %644 = vdwg.mxu0
  %645 = vmatpush.bf16.msra.mxu0 %v513
  %646 = vmatpush.bf16.msra.mxu0 %v512
  %647 = vmatpush.bf16.msra.mxu0 %v511
  %648 = vmatpush.bf16.msra.mxu0 %v510
  %649 = vmatpush.bf16.msra.mxu0 %v509
  %650 = vmatpush.bf16.msra.mxu0 %v508
  %651 = vmatpush.bf16.msra.mxu0 %v507
  %652 = vmatpush.bf16.msra.mxu0 %v506
  %653 = vmatmul.bf16.gmra.mxu0 %v211
  %v654 = vpop.f32.mrf.mxu0
  %v655 = vadd.f32 %v636, %v654
  %v656 = vpop.f32.mrf.mxu0
  %v657 = vadd.f32 %v638, %v656
  %658 = vmatmul.bf16.gmra.mxu0 %v219
  %v659 = vpop.f32.mrf.mxu0
  %v660 = vadd.f32 %v641, %v659
  %v661 = vpop.f32.mrf.mxu0
  %v662 = vadd.f32 %v643, %v661
  %663 = vdwg.mxu0
  %664 = vmatpush.bf16.msra.mxu0 %v521
  %665 = vmatpush.bf16.msra.mxu0 %v520
  %666 = vmatpush.bf16.msra.mxu0 %v519
  %667 = vmatpush.bf16.msra.mxu0 %v518
  %668 = vmatpush.bf16.msra.mxu0 %v517
  %669 = vmatpush.bf16.msra.mxu0 %v516
  %670 = vmatpush.bf16.msra.mxu0 %v515
  %671 = vmatpush.bf16.msra.mxu0 %v514
  %672 = vmatmul.bf16.gmra.mxu0 %v212
  %v673 = vpop.f32.mrf.mxu0
  %v674 = vadd.f32 %v655, %v673
  %v675 = vpop.f32.mrf.mxu0
  %v676 = vadd.f32 %v657, %v675
  %677 = vmatmul.bf16.gmra.mxu0 %v220
  %v678 = vpop.f32.mrf.mxu0
  %v679 = vadd.f32 %v660, %v678
  %v680 = vpop.f32.mrf.mxu0
  %v681 = vadd.f32 %v662, %v680
  %682 = vdwg.mxu0
  %683 = vmatpush.bf16.msra.mxu0 %v529
  %684 = vmatpush.bf16.msra.mxu0 %v528
  %685 = vmatpush.bf16.msra.mxu0 %v527
  %686 = vmatpush.bf16.msra.mxu0 %v526
  %687 = vmatpush.bf16.msra.mxu0 %v525
  %688 = vmatpush.bf16.msra.mxu0 %v524
  %689 = vmatpush.bf16.msra.mxu0 %v523
  %690 = vmatpush.bf16.msra.mxu0 %v522
  %691 = vmatmul.bf16.gmra.mxu0 %v213
  %v692 = vpop.f32.mrf.mxu0
  %v693 = vadd.f32 %v674, %v692
  %v694 = vpop.f32.mrf.mxu0
  %v695 = vadd.f32 %v676, %v694
  %696 = vmatmul.bf16.gmra.mxu0 %v221
  %v697 = vpop.f32.mrf.mxu0
  %v698 = vadd.f32 %v679, %v697
  %v699 = vpop.f32.mrf.mxu0
  %v700 = vadd.f32 %v681, %v699
  %701 = vdwg.mxu0
  %702 = vmatpush.bf16.msra.mxu0 %v537
  %703 = vmatpush.bf16.msra.mxu0 %v536
  %704 = vmatpush.bf16.msra.mxu0 %v535
  %705 = vmatpush.bf16.msra.mxu0 %v534
  %706 = vmatpush.bf16.msra.mxu0 %v533
  %707 = vmatpush.bf16.msra.mxu0 %v532
  %708 = vmatpush.bf16.msra.mxu0 %v531
  %709 = vmatpush.bf16.msra.mxu0 %v530
  %710 = vmatmul.bf16.gmra.mxu0 %v214
  %v711 = vpop.f32.mrf.mxu0
  %v712 = vadd.f32 %v693, %v711
  %v713 = vpop.f32.mrf.mxu0
  %v714 = vadd.f32 %v695, %v713
  %715 = vmatmul.bf16.gmra.mxu0 %v222
  %v716 = vpop.f32.mrf.mxu0
  %v717 = vadd.f32 %v698, %v716
  %v718 = vpop.f32.mrf.mxu0
  %v719 = vadd.f32 %v700, %v718
  %720 = vdwg.mxu0
  %721 = vmatpush.bf16.msra.mxu0 %v545
  %722 = vmatpush.bf16.msra.mxu0 %v544
  %723 = vmatpush.bf16.msra.mxu0 %v543
  %724 = vmatpush.bf16.msra.mxu0 %v542
  %725 = vmatpush.bf16.msra.mxu0 %v541
  %726 = vmatpush.bf16.msra.mxu0 %v540
  %727 = vmatpush.bf16.msra.mxu0 %v539
  %728 = vmatpush.bf16.msra.mxu0 %v538
  %729 = vmatmul.bf16.gmra.mxu0 %v215
  %v730 = vpop.f32.mrf.mxu0
  %v731 = vadd.f32 %v712, %v730
  %v732 = vpop.f32.mrf.mxu0
  %v733 = vadd.f32 %v714, %v732
  %734 = vmatmul.bf16.gmra.mxu0 %v223
  %v735 = vpop.f32.mrf.mxu0
  %v736 = vadd.f32 %v717, %v735
  %v737 = vpop.f32.mrf.mxu0
  %v738 = vadd.f32 %v719, %v737
  %739 = vdwg.mxu0
  %740 = vmatpush.bf16.msra.mxu0 %v553
  %741 = vmatpush.bf16.msra.mxu0 %v552
  %742 = vmatpush.bf16.msra.mxu0 %v551
  %743 = vmatpush.bf16.msra.mxu0 %v550
  %744 = vmatpush.bf16.msra.mxu0 %v549
  %745 = vmatpush.bf16.msra.mxu0 %v548
  %746 = vmatpush.bf16.msra.mxu0 %v547
  %747 = vmatpush.bf16.msra.mxu0 %v546
  %748 = vmatmul.bf16.gmra.mxu0 %v216
  %v749 = vpop.f32.mrf.mxu0
  %v750 = vadd.f32 %v731, %v749
  %v751 = vpop.f32.mrf.mxu0
  %v752 = vadd.f32 %v733, %v751
  %753 = vmatmul.bf16.gmra.mxu0 %v224
  %v754 = vpop.f32.mrf.mxu0
  %v755 = vadd.f32 %v736, %v754
  %v756 = vpop.f32.mrf.mxu0
  %v757 = vadd.f32 %v738, %v756
  %758 = vdwg.mxu0
  %759 = vmatpush.bf16.msra.mxu0 %v561
  %760 = vmatpush.bf16.msra.mxu0 %v560
  %761 = vmatpush.bf16.msra.mxu0 %v559
  %762 = vmatpush.bf16.msra.mxu0 %v558
  %763 = vmatpush.bf16.msra.mxu0 %v557
  %764 = vmatpush.bf16.msra.mxu0 %v556
  %765 = vmatpush.bf16.msra.mxu0 %v555
  %766 = vmatpush.bf16.msra.mxu0 %v554
  %767 = vmatmul.bf16.gmra.mxu0 %v217
  %v768 = vpop.f32.mrf.mxu0
  %v769 = vadd.f32 %v750, %v768
  %v770 = vpop.f32.mrf.mxu0
  %v771 = vadd.f32 %v752, %v770
  %772 = vmatmul.bf16.gmra.mxu0 %v225
  %v773 = vpop.f32.mrf.mxu0
  %v774 = vadd.f32 %v755, %v773
  %v775 = vpop.f32.mrf.mxu0
  %v776 = vadd.f32 %v757, %v775
  %777 = vdwg.mxu0
  %v778 = vmax.f32 %v769, 0.0
  %v779 = vmax.f32 %v771, 0.0
  %v780 = vmax.f32 %v774, 0.0
  %v781 = vmax.f32 %v776, 0.0
  %782 = vst [vmem:[%s3] sm:$0xff] %v778
  %783 = vst [vmem:[%s3 + $0x8] sm:$0xff] %v779
  %784 = vst [vmem:[%s3 + $0x10] sm:$0xff] %v780
  %785 = vst [vmem:[%s3 + $0x18] sm:$0xff] %v781
  // Predicated region
  $region14: #{autoencoder_forward.5} parent=0 // pred_check
    _
  $region15: #{autoencoder_forward.5} parent=0 // pred_check_branch
    %787 = sbr.rel (0) target = $region17
  $region16: #{autoencoder_forward.5} parent=0 // pred_region
    _
  $region17: #{autoencoder_forward.5} parent=0 // pred_fallthru
    _
  // Predicated region
  $region18: #{autoencoder_forward.5} parent=0 // pred_check
    _
  $region19: #{autoencoder_forward.5} parent=0 // pred_check_branch
    %789 = sbr.rel (0) target = $region21
  $region20: #{autoencoder_forward.5} parent=0 // pred_region
    _
  $region21: #{autoencoder_forward.5} parent=0 // pred_fallthru
    _

// kernel: autoencoder_forward.6
$region0: #{autoencoder_forward.6}
  #allocation0 [shape = 'u32[]', space=smem, size = 0x4, offset = 0x4, fixed_abs, tag = 'smem constant byte address 0x4 - core index']
  #allocation1 [shape = 'u32[72,128]{1,0:T(1,128)}', space=vmem, size = 0x9000, scoped, tag = 'internal scratch']
  %s0 = inlined_call_operand.vmem [shape: bf16[32,1152], index: 0, kind: input, shape index: {}]
  %s1 = inlined_call_operand.vmem [shape: bf16[1152,256], index: 1, kind: input, shape index: {}]
  %s2 = inlined_call_operand.vmem [shape: f32[1,256], index: 2, kind: input, shape index: {}]
  %s3 = inlined_call_operand.vmem [shape: f32[32,256], index: 3, kind: output, shape index: {}]
  %s4 = sld [smem:[#allocation0]]
  $region22: #{autoencoder_forward.6} parent=0
    _
  %s6 = ssub.s32 1, %s4
  %s7 = scalar_select 0, %s6, %s4
  // Predicated region
  $region2: #{autoencoder_forward.6} parent=0 // pred_check
    _
  $region3: #{autoencoder_forward.6} parent=0 // pred_check_branch
    %9 = sbr.rel (0) target = $region5
  $region4: #{autoencoder_forward.6} parent=0 // pred_region
    _
  $region5: #{autoencoder_forward.6} parent=0 // pred_fallthru
    _
  // Predicated region
  $region6: #{autoencoder_forward.6} parent=0 // pred_check
    _
  $region7: #{autoencoder_forward.6} parent=0 // pred_check_branch
    %11 = sbr.rel (0) target = $region9
  $region8: #{autoencoder_forward.6} parent=0 // pred_region
    _
  $region9: #{autoencoder_forward.6} parent=0 // pred_fallthru
    _
  // Predicated region
  $region10: #{autoencoder_forward.6} parent=0 // pred_check
    _
  $region11: #{autoencoder_forward.6} parent=0 // pred_check_branch
    %13 = sbr.rel (0) target = $region13
  $region12: #{autoencoder_forward.6} parent=0 // pred_region
    _
  $region13: #{autoencoder_forward.6} parent=0 // pred_fallthru
    _
  %v14 = vld [vmem:[%s0] sm:$0xff]
  %v15 = vld [vmem:[%s0 + $0x8] sm:$0xff]
  %v16 = vld [vmem:[%s0 + $0x10] sm:$0xff]
  %v17 = vld [vmem:[%s0 + $0x18] sm:$0xff]
  %v18 = vld [vmem:[%s0 + $0x20] sm:$0xf]
  %v19 = vld [vmem:[%s0 + $0x24] sm:$0xff]
  %v20 = vld [vmem:[%s0 + $0x2c] sm:$0xff]
  %v21 = vld [vmem:[%s0 + $0x34] sm:$0xff]
  %v22 = vld [vmem:[%s0 + $0x3c] sm:$0xff]
  %v23 = vld [vmem:[%s0 + $0x44] sm:$0xf]
  %v24 = vld [vmem:[%s0 + $0x48] sm:$0xff]
  %v25 = vld [vmem:[%s0 + $0x50] sm:$0xff]
  %v26 = vld [vmem:[%s0 + $0x58] sm:$0xff]
  %v27 = vld [vmem:[%s0 + $0x60] sm:$0xff]
  %v28 = vld [vmem:[%s0 + $0x68] sm:$0xf]
  %v29 = vld [vmem:[%s0 + $0x6c] sm:$0xff]
  %v30 = vld [vmem:[%s0 + $0x74] sm:$0xff]
  %v31 = vld [vmem:[%s0 + $0x7c] sm:$0xff]
  %v32 = vld [vmem:[%s0 + $0x84] sm:$0xff]
  %v33 = vld [vmem:[%s0 + $0x8c] sm:$0xf]
  %v34 = vld [vmem:[%s1] sm:$0xff]
  %v35 = vld [vmem:[%s1 + $0x8] sm:$0xff]
  %v36 = vld [vmem:[%s1 + $0x10] sm:$0xff]
  %v37 = vld [vmem:[%s1 + $0x18] sm:$0xff]
  %v38 = vld [vmem:[%s1 + $0x20] sm:$0xff]
  %v39 = vld [vmem:[%s1 + $0x28] sm:$0xff]
  %v40 = vld [vmem:[%s1 + $0x30] sm:$0xff]
  %v41 = vld [vmem:[%s1 + $0x38] sm:$0xff]
  %v42 = vld [vmem:[%s1 + $0x40] sm:$0xff]
  %v43 = vld [vmem:[%s1 + $0x48] sm:$0xff]
  %v44 = vld [vmem:[%s1 + $0x50] sm:$0xff]
  %v45 = vld [vmem:[%s1 + $0x58] sm:$0xff]
  %v46 = vld [vmem:[%s1 + $0x60] sm:$0xff]
  %v47 = vld [vmem:[%s1 + $0x68] sm:$0xff]
  %v48 = vld [vmem:[%s1 + $0x70] sm:$0xff]
  %v49 = vld [vmem:[%s1 + $0x78] sm:$0xff]
  %v50 = vld [vmem:[%s1 + $0x80] sm:$0xff]
  %v51 = vld [vmem:[%s1 + $0x88] sm:$0xff]
  %v52 = vld [vmem:[%s1 + $0x90] sm:$0xff]
  %v53 = vld [vmem:[%s1 + $0x98] sm:$0xff]
  %v54 = vld [vmem:[%s1 + $0xa0] sm:$0xff]
  %v55 = vld [vmem:[%s1 + $0xa8] sm:$0xff]
  %v56 = vld [vmem:[%s1 + $0xb0] sm:$0xff]
  %v57 = vld [vmem:[%s1 + $0xb8] sm:$0xff]
  %v58 = vld [vmem:[%s1 + $0xc0] sm:$0xff]
  %v59 = vld [vmem:[%s1 + $0xc8] sm:$0xff]
  %v60 = vld [vmem:[%s1 + $0xd0] sm:$0xff]
  %v61 = vld [vmem:[%s1 + $0xd8] sm:$0xff]
  %v62 = vld [vmem:[%s1 + $0xe0] sm:$0xff]
  %v63 = vld [vmem:[%s1 + $0xe8] sm:$0xff]
  %v64 = vld [vmem:[%s1 + $0xf0] sm:$0xff]
  %v65 = vld [vmem:[%s1 + $0xf8] sm:$0xff]
  %v66 = vld [vmem:[%s1 + $0x100] sm:$0xff]
  %v67 = vld [vmem:[%s1 + $0x108] sm:$0xff]
  %v68 = vld [vmem:[%s1 + $0x110] sm:$0xff]
  %v69 = vld [vmem:[%s1 + $0x118] sm:$0xff]
  %v70 = vld [vmem:[%s1 + $0x120] sm:$0xff]
  %v71 = vld [vmem:[%s1 + $0x128] sm:$0xff]
  %v72 = vld [vmem:[%s1 + $0x130] sm:$0xff]
  %v73 = vld [vmem:[%s1 + $0x138] sm:$0xff]
  %v74 = vld [vmem:[%s1 + $0x140] sm:$0xff]
  %v75 = vld [vmem:[%s1 + $0x148] sm:$0xff]
  %v76 = vld [vmem:[%s1 + $0x150] sm:$0xff]
  %v77 = vld [vmem:[%s1 + $0x158] sm:$0xff]
  %v78 = vld [vmem:[%s1 + $0x160] sm:$0xff]
  %v79 = vld [vmem:[%s1 + $0x168] sm:$0xff]
  %v80 = vld [vmem:[%s1 + $0x170] sm:$0xff]
  %v81 = vld [vmem:[%s1 + $0x178] sm:$0xff]
  %v82 = vld [vmem:[%s1 + $0x180] sm:$0xff]
  %v83 = vld [vmem:[%s1 + $0x188] sm:$0xff]
  %v84 = vld [vmem:[%s1 + $0x190] sm:$0xff]
  %v85 = vld [vmem:[%s1 + $0x198] sm:$0xff]
  %v86 = vld [vmem:[%s1 + $0x1a0] sm:$0xff]
  %v87 = vld [vmem:[%s1 + $0x1a8] sm:$0xff]
  %v88 = vld [vmem:[%s1 + $0x1b0] sm:$0xff]
  %v89 = vld [vmem:[%s1 + $0x1b8] sm:$0xff]
  %v90 = vld [vmem:[%s1 + $0x1c0] sm:$0xff]
  %v91 = vld [vmem:[%s1 + $0x1c8] sm:$0xff]
  %v92 = vld [vmem:[%s1 + $0x1d0] sm:$0xff]
  %v93 = vld [vmem:[%s1 + $0x1d8] sm:$0xff]
  %v94 = vld [vmem:[%s1 + $0x1e0] sm:$0xff]
  %v95 = vld [vmem:[%s1 + $0x1e8] sm:$0xff]
  %v96 = vld [vmem:[%s1 + $0x1f0] sm:$0xff]
  %v97 = vld [vmem:[%s1 + $0x1f8] sm:$0xff]
  %v98 = vld [vmem:[%s1 + $0x200] sm:$0xff]
  %v99 = vld [vmem:[%s1 + $0x208] sm:$0xff]
  %v100 = vld [vmem:[%s1 + $0x210] sm:$0xff]
  %v101 = vld [vmem:[%s1 + $0x218] sm:$0xff]
  %v102 = vld [vmem:[%s1 + $0x220] sm:$0xff]
  %v103 = vld [vmem:[%s1 + $0x228] sm:$0xff]
  %v104 = vld [vmem:[%s1 + $0x230] sm:$0xff]
  %v105 = vld [vmem:[%s1 + $0x238] sm:$0xff]
  %v106 = vld [vmem:[%s1 + $0x240] sm:$0xff]
  %v107 = vld [vmem:[%s1 + $0x248] sm:$0xff]
  %v108 = vld [vmem:[%s1 + $0x250] sm:$0xff]
  %v109 = vld [vmem:[%s1 + $0x258] sm:$0xff]
  %v110 = vld [vmem:[%s1 + $0x260] sm:$0xff]
  %v111 = vld [vmem:[%s1 + $0x268] sm:$0xff]
  %v112 = vld [vmem:[%s1 + $0x270] sm:$0xff]
  %v113 = vld [vmem:[%s1 + $0x278] sm:$0xff]
  %v114 = vld [vmem:[%s1 + $0x280] sm:$0xff]
  %v115 = vld [vmem:[%s1 + $0x288] sm:$0xff]
  %v116 = vld [vmem:[%s1 + $0x290] sm:$0xff]
  %v117 = vld [vmem:[%s1 + $0x298] sm:$0xff]
  %v118 = vld [vmem:[%s1 + $0x2a0] sm:$0xff]
  %v119 = vld [vmem:[%s1 + $0x2a8] sm:$0xff]
  %v120 = vld [vmem:[%s1 + $0x2b0] sm:$0xff]
  %v121 = vld [vmem:[%s1 + $0x2b8] sm:$0xff]
  %v122 = vld [vmem:[%s1 + $0x2c0] sm:$0xff]
  %v123 = vld [vmem:[%s1 + $0x2c8] sm:$0xff]
  %v124 = vld [vmem:[%s1 + $0x2d0] sm:$0xff]
  %v125 = vld [vmem:[%s1 + $0x2d8] sm:$0xff]
  %v126 = vld [vmem:[%s1 + $0x2e0] sm:$0xff]
  %v127 = vld [vmem:[%s1 + $0x2e8] sm:$0xff]
  %v128 = vld [vmem:[%s1 + $0x2f0] sm:$0xff]
  %v129 = vld [vmem:[%s1 + $0x2f8] sm:$0xff]
  %v130 = vld [vmem:[%s1 + $0x300] sm:$0xff]
  %v131 = vld [vmem:[%s1 + $0x308] sm:$0xff]
  %v132 = vld [vmem:[%s1 + $0x310] sm:$0xff]
  %v133 = vld [vmem:[%s1 + $0x318] sm:$0xff]
  %v134 = vld [vmem:[%s1 + $0x320] sm:$0xff]
  %v135 = vld [vmem:[%s1 + $0x328] sm:$0xff]
  %v136 = vld [vmem:[%s1 + $0x330] sm:$0xff]
  %v137 = vld [vmem:[%s1 + $0x338] sm:$0xff]
  %v138 = vld [vmem:[%s1 + $0x340] sm:$0xff]
  %v139 = vld [vmem:[%s1 + $0x348] sm:$0xff]
  %v140 = vld [vmem:[%s1 + $0x350] sm:$0xff]
  %v141 = vld [vmem:[%s1 + $0x358] sm:$0xff]
  %v142 = vld [vmem:[%s1 + $0x360] sm:$0xff]
  %v143 = vld [vmem:[%s1 + $0x368] sm:$0xff]
  %v144 = vld [vmem:[%s1 + $0x370] sm:$0xff]
  %v145 = vld [vmem:[%s1 + $0x378] sm:$0xff]
  %v146 = vld [vmem:[%s1 + $0x380] sm:$0xff]
  %v147 = vld [vmem:[%s1 + $0x388] sm:$0xff]
  %v148 = vld [vmem:[%s1 + $0x390] sm:$0xff]
  %v149 = vld [vmem:[%s1 + $0x398] sm:$0xff]
  %v150 = vld [vmem:[%s1 + $0x3a0] sm:$0xff]
  %v151 = vld [vmem:[%s1 + $0x3a8] sm:$0xff]
  %v152 = vld [vmem:[%s1 + $0x3b0] sm:$0xff]
  %v153 = vld [vmem:[%s1 + $0x3b8] sm:$0xff]
  %v154 = vld [vmem:[%s1 + $0x3c0] sm:$0xff]
  %v155 = vld [vmem:[%s1 + $0x3c8] sm:$0xff]
  %v156 = vld [vmem:[%s1 + $0x3d0] sm:$0xff]
  %v157 = vld [vmem:[%s1 + $0x3d8] sm:$0xff]
  %v158 = vld [vmem:[%s1 + $0x3e0] sm:$0xff]
  %v159 = vld [vmem:[%s1 + $0x3e8] sm:$0xff]
  %v160 = vld [vmem:[%s1 + $0x3f0] sm:$0xff]
  %v161 = vld [vmem:[%s1 + $0x3f8] sm:$0xff]
  %v162 = vld [vmem:[%s1 + $0x400] sm:$0xff]
  %v163 = vld [vmem:[%s1 + $0x408] sm:$0xff]
  %v164 = vld [vmem:[%s1 + $0x410] sm:$0xff]
  %v165 = vld [vmem:[%s1 + $0x418] sm:$0xff]
  %v166 = vld [vmem:[%s1 + $0x420] sm:$0xff]
  %v167 = vld [vmem:[%s1 + $0x428] sm:$0xff]
  %v168 = vld [vmem:[%s1 + $0x430] sm:$0xff]
  %v169 = vld [vmem:[%s1 + $0x438] sm:$0xff]
  %v170 = vld [vmem:[%s1 + $0x440] sm:$0xff]
  %v171 = vld [vmem:[%s1 + $0x448] sm:$0xff]
  %v172 = vld [vmem:[%s1 + $0x450] sm:$0xff]
  %v173 = vld [vmem:[%s1 + $0x458] sm:$0xff]
  %v174 = vld [vmem:[%s1 + $0x460] sm:$0xff]
  %v175 = vld [vmem:[%s1 + $0x468] sm:$0xff]
  %v176 = vld [vmem:[%s1 + $0x470] sm:$0xff]
  %v177 = vld [vmem:[%s1 + $0x478] sm:$0xff]
  %v178 = vld [vmem:[%s2] sm:$0x3]
  %v180 = vperm.slane %v178, 0
  %v181 = vperm.slane %v178, 1
  %v204 = vunpack.c.l.b16 %v14
  %v205 = vunpack.c.h.b16 %v14
  %v206 = vunpack.c.l.b16 %v15
  %v207 = vunpack.c.h.b16 %v15
  %v208 = vunpack.c.l.b16 %v16
  %v209 = vunpack.c.h.b16 %v16
  %v210 = vunpack.c.l.b16 %v17
  %v211 = vunpack.c.h.b16 %v17
  %v212 = vunpack.c.l.b16 %v18
  %v213 = vunpack.c.l.b16 %v19
  %v214 = vunpack.c.h.b16 %v19
  %v215 = vunpack.c.l.b16 %v20
  %v216 = vunpack.c.h.b16 %v20
  %v217 = vunpack.c.l.b16 %v21
  %v218 = vunpack.c.h.b16 %v21
  %v219 = vunpack.c.l.b16 %v22
  %v220 = vunpack.c.h.b16 %v22
  %v221 = vunpack.c.l.b16 %v23
  %v222 = vunpack.c.l.b16 %v24
  %v223 = vunpack.c.h.b16 %v24
  %v224 = vunpack.c.l.b16 %v25
  %v225 = vunpack.c.h.b16 %v25
  %v226 = vunpack.c.l.b16 %v26
  %v227 = vunpack.c.h.b16 %v26
  %v228 = vunpack.c.l.b16 %v27
  %v229 = vunpack.c.h.b16 %v27
  %v230 = vunpack.c.l.b16 %v28
  %v231 = vunpack.c.l.b16 %v29
  %v232 = vunpack.c.h.b16 %v29
  %v233 = vunpack.c.l.b16 %v30
  %v234 = vunpack.c.h.b16 %v30
  %v235 = vunpack.c.l.b16 %v31
  %v236 = vunpack.c.h.b16 %v31
  %v237 = vunpack.c.l.b16 %v32
  %v238 = vunpack.c.h.b16 %v32
  %v239 = vunpack.c.l.b16 %v33
  %v240 = vpack.c.b16 %v213, %v204
  %v241 = vpack.c.b16 %v214, %v205
  %v242 = vpack.c.b16 %v215, %v206
  %v243 = vpack.c.b16 %v216, %v207
  %v244 = vpack.c.b16 %v217, %v208
  %v245 = vpack.c.b16 %v218, %v209
  %v246 = vpack.c.b16 %v219, %v210
  %v247 = vpack.c.b16 %v220, %v211
  %v248 = vpack.c.b16 %v221, %v212
  %v249 = vpack.c.b16 %v231, %v222
  %v250 = vpack.c.b16 %v232, %v223
  %v251 = vpack.c.b16 %v233, %v224
  %v252 = vpack.c.b16 %v234, %v225
  %v253 = vpack.c.b16 %v235, %v226
  %v254 = vpack.c.b16 %v236, %v227
  %v255 = vpack.c.b16 %v237, %v228
  %v256 = vpack.c.b16 %v238, %v229
  %v257 = vpack.c.b16 %v239, %v230
  %v420 = vunpack.c.l.b16 %v34
  %v421 = vunpack.c.h.b16 %v34
  %v422 = vunpack.c.l.b16 %v35
  %v423 = vunpack.c.h.b16 %v35
  %v424 = vunpack.c.l.b16 %v36
  %v425 = vunpack.c.h.b16 %v36
  %v426 = vunpack.c.l.b16 %v37
  %v427 = vunpack.c.h.b16 %v37
  %v428 = vunpack.c.l.b16 %v38
  %v429 = vunpack.c.h.b16 %v38
  %v430 = vunpack.c.l.b16 %v39
  %v431 = vunpack.c.h.b16 %v39
  %v432 = vunpack.c.l.b16 %v40
  %v433 = vunpack.c.h.b16 %v40
  %v434 = vunpack.c.l.b16 %v41
  %v435 = vunpack.c.h.b16 %v41
  %v436 = vunpack.c.l.b16 %v42
  %v437 = vunpack.c.h.b16 %v42
  %v438 = vunpack.c.l.b16 %v43
  %v439 = vunpack.c.h.b16 %v43
  %v440 = vunpack.c.l.b16 %v44
  %v441 = vunpack.c.h.b16 %v44
  %v442 = vunpack.c.l.b16 %v45
  %v443 = vunpack.c.h.b16 %v45
  %v444 = vunpack.c.l.b16 %v46
  %v445 = vunpack.c.h.b16 %v46
  %v446 = vunpack.c.l.b16 %v47
  %v447 = vunpack.c.h.b16 %v47
  %v448 = vunpack.c.l.b16 %v48
  %v449 = vunpack.c.h.b16 %v48
  %v450 = vunpack.c.l.b16 %v49
  %v451 = vunpack.c.h.b16 %v49
  %v452 = vunpack.c.l.b16 %v50
  %v453 = vunpack.c.h.b16 %v50
  %v454 = vunpack.c.l.b16 %v51
  %v455 = vunpack.c.h.b16 %v51
  %v456 = vunpack.c.l.b16 %v52
  %v457 = vunpack.c.h.b16 %v52
  %v458 = vunpack.c.l.b16 %v53
  %v459 = vunpack.c.h.b16 %v53
  %v460 = vunpack.c.l.b16 %v54
  %v461 = vunpack.c.h.b16 %v54
  %v462 = vunpack.c.l.b16 %v55
  %v463 = vunpack.c.h.b16 %v55
  %v464 = vunpack.c.l.b16 %v56
  %v465 = vunpack.c.h.b16 %v56
  %v466 = vunpack.c.l.b16 %v57
  %v467 = vunpack.c.h.b16 %v57
  %v468 = vunpack.c.l.b16 %v58
  %v469 = vunpack.c.h.b16 %v58
  %v470 = vunpack.c.l.b16 %v59
  %v471 = vunpack.c.h.b16 %v59
  %v472 = vunpack.c.l.b16 %v60
  %v473 = vunpack.c.h.b16 %v60
  %v474 = vunpack.c.l.b16 %v61
  %v475 = vunpack.c.h.b16 %v61
  %v476 = vunpack.c.l.b16 %v62
  %v477 = vunpack.c.h.b16 %v62
  %v478 = vunpack.c.l.b16 %v63
  %v479 = vunpack.c.h.b16 %v63
  %v480 = vunpack.c.l.b16 %v64
  %v481 = vunpack.c.h.b16 %v64
  %v482 = vunpack.c.l.b16 %v65
  %v483 = vunpack.c.h.b16 %v65
  %v484 = vunpack.c.l.b16 %v66
  %v485 = vunpack.c.h.b16 %v66
  %v486 = vunpack.c.l.b16 %v67
  %v487 = vunpack.c.h.b16 %v67
  %v488 = vunpack.c.l.b16 %v68
  %v489 = vunpack.c.h.b16 %v68
  %v490 = vunpack.c.l.b16 %v69
  %v491 = vunpack.c.h.b16 %v69
  %v492 = vunpack.c.l.b16 %v70
  %v493 = vunpack.c.h.b16 %v70
  %v494 = vunpack.c.l.b16 %v71
  %v495 = vunpack.c.h.b16 %v71
  %v496 = vunpack.c.l.b16 %v72
  %v497 = vunpack.c.h.b16 %v72
  %v498 = vunpack.c.l.b16 %v73
  %v499 = vunpack.c.h.b16 %v73
  %v500 = vunpack.c.l.b16 %v74
  %v501 = vunpack.c.h.b16 %v74
  %v502 = vunpack.c.l.b16 %v75
  %v503 = vunpack.c.h.b16 %v75
  %v504 = vunpack.c.l.b16 %v76
  %v505 = vunpack.c.h.b16 %v76
  %v506 = vunpack.c.l.b16 %v77
  %v507 = vunpack.c.h.b16 %v77
  %v508 = vunpack.c.l.b16 %v78
  %v509 = vunpack.c.h.b16 %v78
  %v510 = vunpack.c.l.b16 %v79
  %v511 = vunpack.c.h.b16 %v79
  %v512 = vunpack.c.l.b16 %v80
  %v513 = vunpack.c.h.b16 %v80
  %v514 = vunpack.c.l.b16 %v81
  %v515 = vunpack.c.h.b16 %v81
  %v516 = vunpack.c.l.b16 %v82
  %v517 = vunpack.c.h.b16 %v82
  %v518 = vunpack.c.l.b16 %v83
  %v519 = vunpack.c.h.b16 %v83
  %v520 = vunpack.c.l.b16 %v84
  %v521 = vunpack.c.h.b16 %v84
  %v522 = vunpack.c.l.b16 %v85
  %v523 = vunpack.c.h.b16 %v85
  %v524 = vunpack.c.l.b16 %v86
  %v525 = vunpack.c.h.b16 %v86
  %v526 = vunpack.c.l.b16 %v87
  %v527 = vunpack.c.h.b16 %v87
  %v528 = vunpack.c.l.b16 %v88
  %v529 = vunpack.c.h.b16 %v88
  %v530 = vunpack.c.l.b16 %v89
  %v531 = vunpack.c.h.b16 %v89
  %v532 = vunpack.c.l.b16 %v90
  %v533 = vunpack.c.h.b16 %v90
  %v534 = vunpack.c.l.b16 %v91
  %v535 = vunpack.c.h.b16 %v91
  %v536 = vunpack.c.l.b16 %v92
  %v537 = vunpack.c.h.b16 %v92
  %v538 = vunpack.c.l.b16 %v93
  %v539 = vunpack.c.h.b16 %v93
  %v540 = vunpack.c.l.b16 %v94
  %v541 = vunpack.c.h.b16 %v94
  %v542 = vunpack.c.l.b16 %v95
  %v543 = vunpack.c.h.b16 %v95
  %v544 = vunpack.c.l.b16 %v96
  %v545 = vunpack.c.h.b16 %v96
  %v546 = vunpack.c.l.b16 %v97
  %v547 = vunpack.c.h.b16 %v97
  %v548 = vunpack.c.l.b16 %v98
  %v549 = vunpack.c.h.b16 %v98
  %v550 = vunpack.c.l.b16 %v99
  %v551 = vunpack.c.h.b16 %v99
  %v552 = vunpack.c.l.b16 %v100
  %v553 = vunpack.c.h.b16 %v100
  %v554 = vunpack.c.l.b16 %v101
  %v555 = vunpack.c.h.b16 %v101
  %v556 = vunpack.c.l.b16 %v102
  %v557 = vunpack.c.h.b16 %v102
  %v558 = vunpack.c.l.b16 %v103
  %v559 = vunpack.c.h.b16 %v103
  %v560 = vunpack.c.l.b16 %v104
  %v561 = vunpack.c.h.b16 %v104
  %v562 = vunpack.c.l.b16 %v105
  %v563 = vunpack.c.h.b16 %v105
  %v564 = vunpack.c.l.b16 %v106
  %v565 = vunpack.c.h.b16 %v106
  %v566 = vunpack.c.l.b16 %v107
  %v567 = vunpack.c.h.b16 %v107
  %v568 = vunpack.c.l.b16 %v108
  %v569 = vunpack.c.h.b16 %v108
  %v570 = vunpack.c.l.b16 %v109
  %v571 = vunpack.c.h.b16 %v109
  %v572 = vunpack.c.l.b16 %v110
  %v573 = vunpack.c.h.b16 %v110
  %v574 = vunpack.c.l.b16 %v111
  %v575 = vunpack.c.h.b16 %v111
  %v576 = vunpack.c.l.b16 %v112
  %v577 = vunpack.c.h.b16 %v112
  %v578 = vunpack.c.l.b16 %v113
  %v579 = vunpack.c.h.b16 %v113
  %v580 = vunpack.c.l.b16 %v114
  %v581 = vunpack.c.h.b16 %v114
  %v582 = vunpack.c.l.b16 %v115
  %v583 = vunpack.c.h.b16 %v115
  %v584 = vunpack.c.l.b16 %v116
  %v585 = vunpack.c.h.b16 %v116
  %v586 = vunpack.c.l.b16 %v117
  %v587 = vunpack.c.h.b16 %v117
  %v588 = vunpack.c.l.b16 %v118
  %v589 = vunpack.c.h.b16 %v118
  %v590 = vunpack.c.l.b16 %v119
  %v591 = vunpack.c.h.b16 %v119
  %v592 = vunpack.c.l.b16 %v120
  %v593 = vunpack.c.h.b16 %v120
  %v594 = vunpack.c.l.b16 %v121
  %v595 = vunpack.c.h.b16 %v121
  %v596 = vunpack.c.l.b16 %v122
  %v597 = vunpack.c.h.b16 %v122
  %v598 = vunpack.c.l.b16 %v123
  %v599 = vunpack.c.h.b16 %v123
  %v600 = vunpack.c.l.b16 %v124
  %v601 = vunpack.c.h.b16 %v124
  %v602 = vunpack.c.l.b16 %v125
  %v603 = vunpack.c.h.b16 %v125
  %v604 = vunpack.c.l.b16 %v126
  %v605 = vunpack.c.h.b16 %v126
  %v606 = vunpack.c.l.b16 %v127
  %v607 = vunpack.c.h.b16 %v127
  %v608 = vunpack.c.l.b16 %v128
  %v609 = vunpack.c.h.b16 %v128
  %v610 = vunpack.c.l.b16 %v129
  %v611 = vunpack.c.h.b16 %v129
  %v612 = vunpack.c.l.b16 %v130
  %v613 = vunpack.c.h.b16 %v130
  %v614 = vunpack.c.l.b16 %v131
  %v615 = vunpack.c.h.b16 %v131
  %v616 = vunpack.c.l.b16 %v132
  %v617 = vunpack.c.h.b16 %v132
  %v618 = vunpack.c.l.b16 %v133
  %v619 = vunpack.c.h.b16 %v133
  %v620 = vunpack.c.l.b16 %v134
  %v621 = vunpack.c.h.b16 %v134
  %v622 = vunpack.c.l.b16 %v135
  %v623 = vunpack.c.h.b16 %v135
  %v624 = vunpack.c.l.b16 %v136
  %v625 = vunpack.c.h.b16 %v136
  %v626 = vunpack.c.l.b16 %v137
  %v627 = vunpack.c.h.b16 %v137
  %v628 = vunpack.c.l.b16 %v138
  %v629 = vunpack.c.h.b16 %v138
  %v630 = vunpack.c.l.b16 %v139
  %v631 = vunpack.c.h.b16 %v139
  %v632 = vunpack.c.l.b16 %v140
  %v633 = vunpack.c.h.b16 %v140
  %v634 = vunpack.c.l.b16 %v141
  %v635 = vunpack.c.h.b16 %v141
  %v636 = vunpack.c.l.b16 %v142
  %v637 = vunpack.c.h.b16 %v142
  %v638 = vunpack.c.l.b16 %v143
  %v639 = vunpack.c.h.b16 %v143
  %v640 = vunpack.c.l.b16 %v144
  %v641 = vunpack.c.h.b16 %v144
  %v642 = vunpack.c.l.b16 %v145
  %v643 = vunpack.c.h.b16 %v145
  %v644 = vunpack.c.l.b16 %v146
  %v645 = vunpack.c.h.b16 %v146
  %v646 = vunpack.c.l.b16 %v147
  %v647 = vunpack.c.h.b16 %v147
  %v648 = vunpack.c.l.b16 %v148
  %v649 = vunpack.c.h.b16 %v148
  %v650 = vunpack.c.l.b16 %v149
  %v651 = vunpack.c.h.b16 %v149
  %v652 = vunpack.c.l.b16 %v150
  %v653 = vunpack.c.h.b16 %v150
  %v654 = vunpack.c.l.b16 %v151
  %v655 = vunpack.c.h.b16 %v151
  %v656 = vunpack.c.l.b16 %v152
  %v657 = vunpack.c.h.b16 %v152
  %v658 = vunpack.c.l.b16 %v153
  %v659 = vunpack.c.h.b16 %v153
  %v660 = vunpack.c.l.b16 %v154
  %v661 = vunpack.c.h.b16 %v154
  %v662 = vunpack.c.l.b16 %v155
  %v663 = vunpack.c.h.b16 %v155
  %v664 = vunpack.c.l.b16 %v156
  %v665 = vunpack.c.h.b16 %v156
  %v666 = vunpack.c.l.b16 %v157
  %v667 = vunpack.c.h.b16 %v157
  %v668 = vunpack.c.l.b16 %v158
  %v669 = vunpack.c.h.b16 %v158
  %v670 = vunpack.c.l.b16 %v159
  %v671 = vunpack.c.h.b16 %v159
  %v672 = vunpack.c.l.b16 %v160
  %v673 = vunpack.c.h.b16 %v160
  %v674 = vunpack.c.l.b16 %v161
  %v675 = vunpack.c.h.b16 %v161
  %v676 = vunpack.c.l.b16 %v162
  %v677 = vunpack.c.h.b16 %v162
  %v678 = vunpack.c.l.b16 %v163
  %v679 = vunpack.c.h.b16 %v163
  %v680 = vunpack.c.l.b16 %v164
  %v681 = vunpack.c.h.b16 %v164
  %v682 = vunpack.c.l.b16 %v165
  %v683 = vunpack.c.h.b16 %v165
  %v684 = vunpack.c.l.b16 %v166
  %v685 = vunpack.c.h.b16 %v166
  %v686 = vunpack.c.l.b16 %v167
  %v687 = vunpack.c.h.b16 %v167
  %v688 = vunpack.c.l.b16 %v168
  %v689 = vunpack.c.h.b16 %v168
  %v690 = vunpack.c.l.b16 %v169
  %v691 = vunpack.c.h.b16 %v169
  %v692 = vunpack.c.l.b16 %v170
  %v693 = vunpack.c.h.b16 %v170
  %v694 = vunpack.c.l.b16 %v171
  %v695 = vunpack.c.h.b16 %v171
  %v696 = vunpack.c.l.b16 %v172
  %v697 = vunpack.c.h.b16 %v172
  %v698 = vunpack.c.l.b16 %v173
  %v699 = vunpack.c.h.b16 %v173
  %v700 = vunpack.c.l.b16 %v174
  %v701 = vunpack.c.h.b16 %v174
  %v702 = vunpack.c.l.b16 %v175
  %v703 = vunpack.c.h.b16 %v175
  %v704 = vunpack.c.l.b16 %v176
  %v705 = vunpack.c.h.b16 %v176
  %v706 = vunpack.c.l.b16 %v177
  %v707 = vunpack.c.h.b16 %v177
  %v708 = vpack.c.b16 %v422, %v420
  %v709 = vpack.c.b16 %v423, %v421
  %v710 = vpack.c.b16 %v426, %v424
  %v711 = vpack.c.b16 %v427, %v425
  %v712 = vpack.c.b16 %v430, %v428
  %v713 = vpack.c.b16 %v431, %v429
  %v714 = vpack.c.b16 %v434, %v432
  %v715 = vpack.c.b16 %v435, %v433
  %v716 = vpack.c.b16 %v438, %v436
  %v717 = vpack.c.b16 %v439, %v437
  %v718 = vpack.c.b16 %v442, %v440
  %v719 = vpack.c.b16 %v443, %v441
  %v720 = vpack.c.b16 %v446, %v444
  %v721 = vpack.c.b16 %v447, %v445
  %v722 = vpack.c.b16 %v450, %v448
  %v723 = vpack.c.b16 %v451, %v449
  %v724 = vpack.c.b16 %v454, %v452
  %v725 = vpack.c.b16 %v455, %v453
  %v726 = vpack.c.b16 %v458, %v456
  %v727 = vpack.c.b16 %v459, %v457
  %v728 = vpack.c.b16 %v462, %v460
  %v729 = vpack.c.b16 %v463, %v461
  %v730 = vpack.c.b16 %v466, %v464
  %v731 = vpack.c.b16 %v467, %v465
  %v732 = vpack.c.b16 %v470, %v468
  %v733 = vpack.c.b16 %v471, %v469
  %v734 = vpack.c.b16 %v474, %v472
  %v735 = vpack.c.b16 %v475, %v473
  %v736 = vpack.c.b16 %v478, %v476
  %v737 = vpack.c.b16 %v479, %v477
  %v738 = vpack.c.b16 %v482, %v480
  %v739 = vpack.c.b16 %v483, %v481
  %v740 = vpack.c.b16 %v486, %v484
  %v741 = vpack.c.b16 %v487, %v485
  %v742 = vpack.c.b16 %v490, %v488
  %v743 = vpack.c.b16 %v491, %v489
  %v744 = vpack.c.b16 %v494, %v492
  %v745 = vpack.c.b16 %v495, %v493
  %v746 = vpack.c.b16 %v498, %v496
  %v747 = vpack.c.b16 %v499, %v497
  %v748 = vpack.c.b16 %v502, %v500
  %v749 = vpack.c.b16 %v503, %v501
  %v750 = vpack.c.b16 %v506, %v504
  %v751 = vpack.c.b16 %v507, %v505
  %v752 = vpack.c.b16 %v510, %v508
  %v753 = vpack.c.b16 %v511, %v509
  %v754 = vpack.c.b16 %v514, %v512
  %v755 = vpack.c.b16 %v515, %v513
  %v756 = vpack.c.b16 %v518, %v516
  %v757 = vpack.c.b16 %v519, %v517
  %v758 = vpack.c.b16 %v522, %v520
  %v759 = vpack.c.b16 %v523, %v521
  %v760 = vpack.c.b16 %v526, %v524
  %v761 = vpack.c.b16 %v527, %v525
  %v762 = vpack.c.b16 %v530, %v528
  %v763 = vpack.c.b16 %v531, %v529
  %v764 = vpack.c.b16 %v534, %v532
  %v765 = vpack.c.b16 %v535, %v533
  %v766 = vpack.c.b16 %v538, %v536
  %v767 = vpack.c.b16 %v539, %v537
  %v768 = vpack.c.b16 %v542, %v540
  %v769 = vpack.c.b16 %v543, %v541
  %v770 = vpack.c.b16 %v546, %v544
  %v771 = vpack.c.b16 %v547, %v545
  %v772 = vpack.c.b16 %v550, %v548
  %v773 = vpack.c.b16 %v551, %v549
  %v774 = vpack.c.b16 %v554, %v552
  %v775 = vpack.c.b16 %v555, %v553
  %v776 = vpack.c.b16 %v558, %v556
  %v777 = vpack.c.b16 %v559, %v557
  %v778 = vpack.c.b16 %v562, %v560
  %v779 = vpack.c.b16 %v563, %v561
  %v780 = vpack.c.b16 %v566, %v564
  %v781 = vpack.c.b16 %v567, %v565
  %v782 = vpack.c.b16 %v570, %v568
  %v783 = vpack.c.b16 %v571, %v569
  %v784 = vpack.c.b16 %v574, %v572
  %v785 = vpack.c.b16 %v575, %v573
  %v786 = vpack.c.b16 %v578, %v576
  %v787 = vpack.c.b16 %v579, %v577
  %v788 = vpack.c.b16 %v582, %v580
  %v789 = vpack.c.b16 %v583, %v581
  %v790 = vpack.c.b16 %v586, %v584
  %v791 = vpack.c.b16 %v587, %v585
  %v792 = vpack.c.b16 %v590, %v588
  %v793 = vpack.c.b16 %v591, %v589
  %v794 = vpack.c.b16 %v594, %v592
  %v795 = vpack.c.b16 %v595, %v593
  %v796 = vpack.c.b16 %v598, %v596
  %v797 = vpack.c.b16 %v599, %v597
  %v798 = vpack.c.b16 %v602, %v600
  %v799 = vpack.c.b16 %v603, %v601
  %v800 = vpack.c.b16 %v606, %v604
  %v801 = vpack.c.b16 %v607, %v605
  %v802 = vpack.c.b16 %v610, %v608
  %v803 = vpack.c.b16 %v611, %v609
  %v804 = vpack.c.b16 %v614, %v612
  %v805 = vpack.c.b16 %v615, %v613
  %v806 = vpack.c.b16 %v618, %v616
  %v807 = vpack.c.b16 %v619, %v617
  %v808 = vpack.c.b16 %v622, %v620
  %v809 = vpack.c.b16 %v623, %v621
  %v810 = vpack.c.b16 %v626, %v624
  %v811 = vpack.c.b16 %v627, %v625
  %v812 = vpack.c.b16 %v630, %v628
  %v813 = vpack.c.b16 %v631, %v629
  %v814 = vpack.c.b16 %v634, %v632
  %v815 = vpack.c.b16 %v635, %v633
  %v816 = vpack.c.b16 %v638, %v636
  %v817 = vpack.c.b16 %v639, %v637
  %v818 = vpack.c.b16 %v642, %v640
  %v819 = vpack.c.b16 %v643, %v641
  %v820 = vpack.c.b16 %v646, %v644
  %v821 = vpack.c.b16 %v647, %v645
  %v822 = vpack.c.b16 %v650, %v648
  %v823 = vpack.c.b16 %v651, %v649
  %v824 = vpack.c.b16 %v654, %v652
  %v825 = vpack.c.b16 %v655, %v653
  %v826 = vpack.c.b16 %v658, %v656
  %v827 = vpack.c.b16 %v659, %v657
  %v828 = vpack.c.b16 %v662, %v660
  %v829 = vpack.c.b16 %v663, %v661
  %v830 = vpack.c.b16 %v666, %v664
  %v831 = vpack.c.b16 %v667, %v665
  %v832 = vpack.c.b16 %v670, %v668
  %v833 = vpack.c.b16 %v671, %v669
  %v834 = vpack.c.b16 %v674, %v672
  %v835 = vpack.c.b16 %v675, %v673
  %v836 = vpack.c.b16 %v678, %v676
  %v837 = vpack.c.b16 %v679, %v677
  %v838 = vpack.c.b16 %v682, %v680
  %v839 = vpack.c.b16 %v683, %v681
  %v840 = vpack.c.b16 %v686, %v684
  %v841 = vpack.c.b16 %v687, %v685
  %v842 = vpack.c.b16 %v690, %v688
  %v843 = vpack.c.b16 %v691, %v689
  %v844 = vpack.c.b16 %v694, %v692
  %v845 = vpack.c.b16 %v695, %v693
  %v846 = vpack.c.b16 %v698, %v696
  %v847 = vpack.c.b16 %v699, %v697
  %v848 = vpack.c.b16 %v702, %v700
  %v849 = vpack.c.b16 %v703, %v701
  %v850 = vpack.c.b16 %v706, %v704
  %v851 = vpack.c.b16 %v707, %v705
  %996 = vmatpush.bf16.msra.mxu0 %v722
  %997 = vmatpush.bf16.msra.mxu0 %v720
  %998 = vmatpush.bf16.msra.mxu0 %v718
  %999 = vmatpush.bf16.msra.mxu0 %v716
  %1000 = vmatpush.bf16.msra.mxu0 %v714
  %1001 = vmatpush.bf16.msra.mxu0 %v712
  %1002 = vmatpush.bf16.msra.mxu0 %v710
  %1003 = vmatpush.bf16.msra.mxu0 %v708
  %1004 = vmatmul.bf16.gmra.mxu0 %v240
  %v1005 = vpop.f32.mrf.mxu0
  %v1006 = vadd.f32 %v180, %v1005
  %v1007 = vpop.f32.mrf.mxu0
  %v1008 = vadd.f32 %v180, %v1007
  %1009 = vmatmul.bf16.gmra.mxu0 %v249
  %v1010 = vpop.f32.mrf.mxu0
  %v1011 = vadd.f32 %v180, %v1010
  %v1012 = vpop.f32.mrf.mxu0
  %v1013 = vadd.f32 %v180, %v1012
  %1014 = vdwg.mxu0
  %1015 = vmatpush.bf16.msra.mxu0 %v738
  %1016 = vmatpush.bf16.msra.mxu0 %v736
  %1017 = vmatpush.bf16.msra.mxu0 %v734
  %1018 = vmatpush.bf16.msra.mxu0 %v732
  %1019 = vmatpush.bf16.msra.mxu0 %v730
  %1020 = vmatpush.bf16.msra.mxu0 %v728
  %1021 = vmatpush.bf16.msra.mxu0 %v726
  %1022 = vmatpush.bf16.msra.mxu0 %v724
  %1023 = vmatmul.bf16.gmra.mxu0 %v241
  %v1024 = vpop.f32.mrf.mxu0
  %v1025 = vadd.f32 %v1006, %v1024
  %v1026 = vpop.f32.mrf.mxu0
  %v1027 = vadd.f32 %v1008, %v1026
  %1028 = vmatmul.bf16.gmra.mxu0 %v250
  %v1029 = vpop.f32.mrf.mxu0
  %v1030 = vadd.f32 %v1011, %v1029
  %v1031 = vpop.f32.mrf.mxu0
  %v1032 = vadd.f32 %v1013, %v1031
  %1033 = vdwg.mxu0
  %1034 = vmatpush.bf16.msra.mxu0 %v754
  %1035 = vmatpush.bf16.msra.mxu0 %v752
  %1036 = vmatpush.bf16.msra.mxu0 %v750
  %1037 = vmatpush.bf16.msra.mxu0 %v748
  %1038 = vmatpush.bf16.msra.mxu0 %v746
  %1039 = vmatpush.bf16.msra.mxu0 %v744
  %1040 = vmatpush.bf16.msra.mxu0 %v742
  %1041 = vmatpush.bf16.msra.mxu0 %v740
  %1042 = vmatmul.bf16.gmra.mxu0 %v242
  %v1043 = vpop.f32.mrf.mxu0
  %v1044 = vadd.f32 %v1025, %v1043
  %v1045 = vpop.f32.mrf.mxu0
  %v1046 = vadd.f32 %v1027, %v1045
  %1047 = vmatmul.bf16.gmra.mxu0 %v251
  %v1048 = vpop.f32.mrf.mxu0
  %v1049 = vadd.f32 %v1030, %v1048
  %v1050 = vpop.f32.mrf.mxu0
  %v1051 = vadd.f32 %v1032, %v1050
  %1052 = vdwg.mxu0
  %1053 = vmatpush.bf16.msra.mxu0 %v770
  %1054 = vmatpush.bf16.msra.mxu0 %v768
  %1055 = vmatpush.bf16.msra.mxu0 %v766
  %1056 = vmatpush.bf16.msra.mxu0 %v764
  %1057 = vmatpush.bf16.msra.mxu0 %v762
  %1058 = vmatpush.bf16.msra.mxu0 %v760
  %1059 = vmatpush.bf16.msra.mxu0 %v758
  %1060 = vmatpush.bf16.msra.mxu0 %v756
  %1061 = vmatmul.bf16.gmra.mxu0 %v243
  %v1062 = vpop.f32.mrf.mxu0
  %v1063 = vadd.f32 %v1044, %v1062
  %v1064 = vpop.f32.mrf.mxu0
  %v1065 = vadd.f32 %v1046, %v1064
  %1066 = vmatmul.bf16.gmra.mxu0 %v252
  %v1067 = vpop.f32.mrf.mxu0
  %v1068 = vadd.f32 %v1049, %v1067
  %v1069 = vpop.f32.mrf.mxu0
  %v1070 = vadd.f32 %v1051, %v1069
  %1071 = vdwg.mxu0
  %1072 = vmatpush.bf16.msra.mxu0 %v786
  %1073 = vmatpush.bf16.msra.mxu0 %v784
  %1074 = vmatpush.bf16.msra.mxu0 %v782
  %1075 = vmatpush.bf16.msra.mxu0 %v780
  %1076 = vmatpush.bf16.msra.mxu0 %v778
  %1077 = vmatpush.bf16.msra.mxu0 %v776
  %1078 = vmatpush.bf16.msra.mxu0 %v774
  %1079 = vmatpush.bf16.msra.mxu0 %v772
  %1080 = vmatmul.bf16.gmra.mxu0 %v244
  %v1081 = vpop.f32.mrf.mxu0
  %v1082 = vadd.f32 %v1063, %v1081
  %v1083 = vpop.f32.mrf.mxu0
  %v1084 = vadd.f32 %v1065, %v1083
  %1085 = vmatmul.bf16.gmra.mxu0 %v253
  %v1086 = vpop.f32.mrf.mxu0
  %v1087 = vadd.f32 %v1068, %v1086
  %v1088 = vpop.f32.mrf.mxu0
  %v1089 = vadd.f32 %v1070, %v1088
  %1090 = vdwg.mxu0
  %1091 = vmatpush.bf16.msra.mxu0 %v802
  %1092 = vmatpush.bf16.msra.mxu0 %v800
  %1093 = vmatpush.bf16.msra.mxu0 %v798
  %1094 = vmatpush.bf16.msra.mxu0 %v796
  %1095 = vmatpush.bf16.msra.mxu0 %v794
  %1096 = vmatpush.bf16.msra.mxu0 %v792
  %1097 = vmatpush.bf16.msra.mxu0 %v790
  %1098 = vmatpush.bf16.msra.mxu0 %v788
  %1099 = vmatmul.bf16.gmra.mxu0 %v245
  %v1100 = vpop.f32.mrf.mxu0
  %v1101 = vadd.f32 %v1082, %v1100
  %v1102 = vpop.f32.mrf.mxu0
  %v1103 = vadd.f32 %v1084, %v1102
  %1104 = vmatmul.bf16.gmra.mxu0 %v254
  %v1105 = vpop.f32.mrf.mxu0
  %v1106 = vadd.f32 %v1087, %v1105
  %v1107 = vpop.f32.mrf.mxu0
  %v1108 = vadd.f32 %v1089, %v1107
  %1109 = vdwg.mxu0
  %1110 = vmatpush.bf16.msra.mxu0 %v818
  %1111 = vmatpush.bf16.msra.mxu0 %v816
  %1112 = vmatpush.bf16.msra.mxu0 %v814
  %1113 = vmatpush.bf16.msra.mxu0 %v812
  %1114 = vmatpush.bf16.msra.mxu0 %v810
  %1115 = vmatpush.bf16.msra.mxu0 %v808
  %1116 = vmatpush.bf16.msra.mxu0 %v806
  %1117 = vmatpush.bf16.msra.mxu0 %v804
  %1118 = vmatmul.bf16.gmra.mxu0 %v246
  %v1119 = vpop.f32.mrf.mxu0
  %v1120 = vadd.f32 %v1101, %v1119
  %v1121 = vpop.f32.mrf.mxu0
  %v1122 = vadd.f32 %v1103, %v1121
  %1123 = vmatmul.bf16.gmra.mxu0 %v255
  %v1124 = vpop.f32.mrf.mxu0
  %v1125 = vadd.f32 %v1106, %v1124
  %v1126 = vpop.f32.mrf.mxu0
  %v1127 = vadd.f32 %v1108, %v1126
  %1128 = vdwg.mxu0
  %1129 = vmatpush.bf16.msra.mxu0 %v834
  %1130 = vmatpush.bf16.msra.mxu0 %v832
  %1131 = vmatpush.bf16.msra.mxu0 %v830
  %1132 = vmatpush.bf16.msra.mxu0 %v828
  %1133 = vmatpush.bf16.msra.mxu0 %v826
  %1134 = vmatpush.bf16.msra.mxu0 %v824
  %1135 = vmatpush.bf16.msra.mxu0 %v822
  %1136 = vmatpush.bf16.msra.mxu0 %v820
  %1137 = vmatmul.bf16.gmra.mxu0 %v247
  %v1138 = vpop.f32.mrf.mxu0
  %v1139 = vadd.f32 %v1120, %v1138
  %v1140 = vpop.f32.mrf.mxu0
  %v1141 = vadd.f32 %v1122, %v1140
  %1142 = vmatmul.bf16.gmra.mxu0 %v256
  %v1143 = vpop.f32.mrf.mxu0
  %v1144 = vadd.f32 %v1125, %v1143
  %v1145 = vpop.f32.mrf.mxu0
  %v1146 = vadd.f32 %v1127, %v1145
  %1147 = vdwg.mxu0
  %1148 = vmatpush.bf16.msra.mxu0 %v850
  %1149 = vmatpush.bf16.msra.mxu0 %v848
  %1150 = vmatpush.bf16.msra.mxu0 %v846
  %1151 = vmatpush.bf16.msra.mxu0 %v844
  %1152 = vmatpush.bf16.msra.mxu0 %v842
  %1153 = vmatpush.bf16.msra.mxu0 %v840
  %1154 = vmatpush.bf16.msra.mxu0 %v838
  %1155 = vmatpush.bf16.msra.mxu0 %v836
  %1156 = vmatmul.bf16.gmra.mxu0 %v248
  %v1157 = vpop.f32.mrf.mxu0
  %v1158 = vadd.f32 %v1139, %v1157
  %v1159 = vpop.f32.mrf.mxu0
  %v1160 = vadd.f32 %v1141, %v1159
  %1161 = vmatmul.bf16.gmra.mxu0 %v257
  %v1162 = vpop.f32.mrf.mxu0
  %v1163 = vadd.f32 %v1144, %v1162
  %v1164 = vpop.f32.mrf.mxu0
  %v1165 = vadd.f32 %v1146, %v1164
  %1166 = vdwg.mxu0
  %1167 = vmatpush.bf16.msra.mxu0 %v723
  %1168 = vmatpush.bf16.msra.mxu0 %v721
  %1169 = vmatpush.bf16.msra.mxu0 %v719
  %1170 = vmatpush.bf16.msra.mxu0 %v717
  %1171 = vmatpush.bf16.msra.mxu0 %v715
  %1172 = vmatpush.bf16.msra.mxu0 %v713
  %1173 = vmatpush.bf16.msra.mxu0 %v711
  %1174 = vmatpush.bf16.msra.mxu0 %v709
  %1175 = vmatmul.bf16.gmra.mxu0 %v240
  %v1176 = vpop.f32.mrf.mxu0
  %v1177 = vadd.f32 %v181, %v1176
  %v1178 = vpop.f32.mrf.mxu0
  %v1179 = vadd.f32 %v181, %v1178
  %1180 = vmatmul.bf16.gmra.mxu0 %v249
  %v1181 = vpop.f32.mrf.mxu0
  %v1182 = vadd.f32 %v181, %v1181
  %v1183 = vpop.f32.mrf.mxu0
  %v1184 = vadd.f32 %v181, %v1183
  %1185 = vdwg.mxu0
  %1186 = vmatpush.bf16.msra.mxu0 %v739
  %1187 = vmatpush.bf16.msra.mxu0 %v737
  %1188 = vmatpush.bf16.msra.mxu0 %v735
  %1189 = vmatpush.bf16.msra.mxu0 %v733
  %1190 = vmatpush.bf16.msra.mxu0 %v731
  %1191 = vmatpush.bf16.msra.mxu0 %v729
  %1192 = vmatpush.bf16.msra.mxu0 %v727
  %1193 = vmatpush.bf16.msra.mxu0 %v725
  %1194 = vmatmul.bf16.gmra.mxu0 %v241
  %v1195 = vpop.f32.mrf.mxu0
  %v1196 = vadd.f32 %v1177, %v1195
  %v1197 = vpop.f32.mrf.mxu0
  %v1198 = vadd.f32 %v1179, %v1197
  %1199 = vmatmul.bf16.gmra.mxu0 %v250
  %v1200 = vpop.f32.mrf.mxu0
  %v1201 = vadd.f32 %v1182, %v1200
  %v1202 = vpop.f32.mrf.mxu0
  %v1203 = vadd.f32 %v1184, %v1202
  %1204 = vdwg.mxu0
  %1205 = vmatpush.bf16.msra.mxu0 %v755
  %1206 = vmatpush.bf16.msra.mxu0 %v753
  %1207 = vmatpush.bf16.msra.mxu0 %v751
  %1208 = vmatpush.bf16.msra.mxu0 %v749
  %1209 = vmatpush.bf16.msra.mxu0 %v747
  %1210 = vmatpush.bf16.msra.mxu0 %v745
  %1211 = vmatpush.bf16.msra.mxu0 %v743
  %1212 = vmatpush.bf16.msra.mxu0 %v741
  %1213 = vmatmul.bf16.gmra.mxu0 %v242
  %v1214 = vpop.f32.mrf.mxu0
  %v1215 = vadd.f32 %v1196, %v1214
  %v1216 = vpop.f32.mrf.mxu0
  %v1217 = vadd.f32 %v1198, %v1216
  %1218 = vmatmul.bf16.gmra.mxu0 %v251
  %v1219 = vpop.f32.mrf.mxu0
  %v1220 = vadd.f32 %v1201, %v1219
  %v1221 = vpop.f32.mrf.mxu0
  %v1222 = vadd.f32 %v1203, %v1221
  %1223 = vdwg.mxu0
  %1224 = vmatpush.bf16.msra.mxu0 %v771
  %1225 = vmatpush.bf16.msra.mxu0 %v769
  %1226 = vmatpush.bf16.msra.mxu0 %v767
  %1227 = vmatpush.bf16.msra.mxu0 %v765
  %1228 = vmatpush.bf16.msra.mxu0 %v763
  %1229 = vmatpush.bf16.msra.mxu0 %v761
  %1230 = vmatpush.bf16.msra.mxu0 %v759
  %1231 = vmatpush.bf16.msra.mxu0 %v757
  %1232 = vmatmul.bf16.gmra.mxu0 %v243
  %v1233 = vpop.f32.mrf.mxu0
  %v1234 = vadd.f32 %v1215, %v1233
  %v1235 = vpop.f32.mrf.mxu0
  %v1236 = vadd.f32 %v1217, %v1235
  %1237 = vmatmul.bf16.gmra.mxu0 %v252
  %v1238 = vpop.f32.mrf.mxu0
  %v1239 = vadd.f32 %v1220, %v1238
  %v1240 = vpop.f32.mrf.mxu0
  %v1241 = vadd.f32 %v1222, %v1240
  %1242 = vdwg.mxu0
  %1243 = vmatpush.bf16.msra.mxu0 %v787
  %1244 = vmatpush.bf16.msra.mxu0 %v785
  %1245 = vmatpush.bf16.msra.mxu0 %v783
  %1246 = vmatpush.bf16.msra.mxu0 %v781
  %1247 = vmatpush.bf16.msra.mxu0 %v779
  %1248 = vmatpush.bf16.msra.mxu0 %v777
  %1249 = vmatpush.bf16.msra.mxu0 %v775
  %1250 = vmatpush.bf16.msra.mxu0 %v773
  %1251 = vmatmul.bf16.gmra.mxu0 %v244
  %v1252 = vpop.f32.mrf.mxu0
  %v1253 = vadd.f32 %v1234, %v1252
  %v1254 = vpop.f32.mrf.mxu0
  %v1255 = vadd.f32 %v1236, %v1254
  %1256 = vmatmul.bf16.gmra.mxu0 %v253
  %v1257 = vpop.f32.mrf.mxu0
  %v1258 = vadd.f32 %v1239, %v1257
  %v1259 = vpop.f32.mrf.mxu0
  %v1260 = vadd.f32 %v1241, %v1259
  %1261 = vdwg.mxu0
  %1262 = vmatpush.bf16.msra.mxu0 %v803
  %1263 = vmatpush.bf16.msra.mxu0 %v801
  %1264 = vmatpush.bf16.msra.mxu0 %v799
  %1265 = vmatpush.bf16.msra.mxu0 %v797
  %1266 = vmatpush.bf16.msra.mxu0 %v795
  %1267 = vmatpush.bf16.msra.mxu0 %v793
  %1268 = vmatpush.bf16.msra.mxu0 %v791
  %1269 = vmatpush.bf16.msra.mxu0 %v789
  %1270 = vmatmul.bf16.gmra.mxu0 %v245
  %v1271 = vpop.f32.mrf.mxu0
  %v1272 = vadd.f32 %v1253, %v1271
  %v1273 = vpop.f32.mrf.mxu0
  %v1274 = vadd.f32 %v1255, %v1273
  %1275 = vmatmul.bf16.gmra.mxu0 %v254
  %v1276 = vpop.f32.mrf.mxu0
  %v1277 = vadd.f32 %v1258, %v1276
  %v1278 = vpop.f32.mrf.mxu0
  %v1279 = vadd.f32 %v1260, %v1278
  %1280 = vdwg.mxu0
  %1281 = vmatpush.bf16.msra.mxu0 %v819
  %1282 = vmatpush.bf16.msra.mxu0 %v817
  %1283 = vmatpush.bf16.msra.mxu0 %v815
  %1284 = vmatpush.bf16.msra.mxu0 %v813
  %1285 = vmatpush.bf16.msra.mxu0 %v811
  %1286 = vmatpush.bf16.msra.mxu0 %v809
  %1287 = vmatpush.bf16.msra.mxu0 %v807
  %1288 = vmatpush.bf16.msra.mxu0 %v805
  %1289 = vmatmul.bf16.gmra.mxu0 %v246
  %v1290 = vpop.f32.mrf.mxu0
  %v1291 = vadd.f32 %v1272, %v1290
  %v1292 = vpop.f32.mrf.mxu0
  %v1293 = vadd.f32 %v1274, %v1292
  %1294 = vmatmul.bf16.gmra.mxu0 %v255
  %v1295 = vpop.f32.mrf.mxu0
  %v1296 = vadd.f32 %v1277, %v1295
  %v1297 = vpop.f32.mrf.mxu0
  %v1298 = vadd.f32 %v1279, %v1297
  %1299 = vdwg.mxu0
  %1300 = vmatpush.bf16.msra.mxu0 %v835
  %1301 = vmatpush.bf16.msra.mxu0 %v833
  %1302 = vmatpush.bf16.msra.mxu0 %v831
  %1303 = vmatpush.bf16.msra.mxu0 %v829
  %1304 = vmatpush.bf16.msra.mxu0 %v827
  %1305 = vmatpush.bf16.msra.mxu0 %v825
  %1306 = vmatpush.bf16.msra.mxu0 %v823
  %1307 = vmatpush.bf16.msra.mxu0 %v821
  %1308 = vmatmul.bf16.gmra.mxu0 %v247
  %v1309 = vpop.f32.mrf.mxu0
  %v1310 = vadd.f32 %v1291, %v1309
  %v1311 = vpop.f32.mrf.mxu0
  %v1312 = vadd.f32 %v1293, %v1311
  %1313 = vmatmul.bf16.gmra.mxu0 %v256
  %v1314 = vpop.f32.mrf.mxu0
  %v1315 = vadd.f32 %v1296, %v1314
  %v1316 = vpop.f32.mrf.mxu0
  %v1317 = vadd.f32 %v1298, %v1316
  %1318 = vdwg.mxu0
  %1319 = vmatpush.bf16.msra.mxu0 %v851
  %1320 = vmatpush.bf16.msra.mxu0 %v849
  %1321 = vmatpush.bf16.msra.mxu0 %v847
  %1322 = vmatpush.bf16.msra.mxu0 %v845
  %1323 = vmatpush.bf16.msra.mxu0 %v843
  %1324 = vmatpush.bf16.msra.mxu0 %v841
  %1325 = vmatpush.bf16.msra.mxu0 %v839
  %1326 = vmatpush.bf16.msra.mxu0 %v837
  %1327 = vmatmul.bf16.gmra.mxu0 %v248
  %v1328 = vpop.f32.mrf.mxu0
  %v1329 = vadd.f32 %v1310, %v1328
  %v1330 = vpop.f32.mrf.mxu0
  %v1331 = vadd.f32 %v1312, %v1330
  %1332 = vmatmul.bf16.gmra.mxu0 %v257
  %v1333 = vpop.f32.mrf.mxu0
  %v1334 = vadd.f32 %v1315, %v1333
  %v1335 = vpop.f32.mrf.mxu0
  %v1336 = vadd.f32 %v1317, %v1335
  %1337 = vdwg.mxu0
  %v1338 = vmax.f32 %v1158, 0.0
  %v1339 = vmax.f32 %v1329, 0.0
  %v1340 = vmax.f32 %v1160, 0.0
  %v1341 = vmax.f32 %v1331, 0.0
  %v1342 = vmax.f32 %v1163, 0.0
  %v1343 = vmax.f32 %v1334, 0.0
  %v1344 = vmax.f32 %v1165, 0.0
  %v1345 = vmax.f32 %v1336, 0.0
  %1346 = vst [vmem:[%s3] sm:$0xff] %v1338
  %1347 = vst [vmem:[%s3 + $0x8] sm:$0xff] %v1339
  %1348 = vst [vmem:[%s3 + $0x10] sm:$0xff] %v1340
  %1349 = vst [vmem:[%s3 + $0x18] sm:$0xff] %v1341
  %1350 = vst [vmem:[%s3 + $0x20] sm:$0xff] %v1342
  %1351 = vst [vmem:[%s3 + $0x28] sm:$0xff] %v1343
  %1352 = vst [vmem:[%s3 + $0x30] sm:$0xff] %v1344
  %1353 = vst [vmem:[%s3 + $0x38] sm:$0xff] %v1345
  // Predicated region
  $region14: #{autoencoder_forward.6} parent=0 // pred_check
    _
  $region15: #{autoencoder_forward.6} parent=0 // pred_check_branch
    %1355 = sbr.rel (0) target = $region17
  $region16: #{autoencoder_forward.6} parent=0 // pred_region
    _
  $region17: #{autoencoder_forward.6} parent=0 // pred_fallthru
    _
  // Predicated region
  $region18: #{autoencoder_forward.6} parent=0 // pred_check
    _
  $region19: #{autoencoder_forward.6} parent=0 // pred_check_branch
    %1357 = sbr.rel (0) target = $region21
  $region20: #{autoencoder_forward.6} parent=0 // pred_region
    _
  $region21: #{autoencoder_forward.6} parent=0 // pred_fallthru
    _

// kernel: tile.18
$region0: #{tile.18}
  #allocation0 [shape = 's32[1]{0}', space=sflag, size = 0x4, scoped, tag = 'scoped memory for tile.18']
  %s0 = inlined_call_operand.vmem [shape: f32[3], index: 0, kind: input, shape index: {}]
  %s1 = inlined_call_operand.vmem [shape: f32[4,3], index: 1, kind: output, shape index: {}]
  // Predicated region
  $region2: #{tile.18} parent=0 // pred_check
    _
  $region3: #{tile.18} parent=0 // pred_check_branch
    %3 = sbr.rel (0) target = $region5
  $region4: #{tile.18} parent=0 // pred_region
    _
  $region5: #{tile.18} parent=0 // pred_fallthru
    _
  %v4 = vld [vmem:[%s0] ss:$0 sm:$0xff]
  %5 = vst [vmem:[%s1] sm:$0xf] %v4

// kernel: tile.19
$region0: #{tile.19}
  %s0 = inlined_call_operand.vmem [shape: f32[4,3], index: 0, kind: input, shape index: {}]
  %s1 = inlined_call_operand.vmem [shape: f32[12], index: 1, kind: output, shape index: {}]
  $region1: #{tile.19} parent=0
    #allocation0 [shape = 'u8[4096]{0}', space=vmem, size = 0x1000, scoped, tag = 'scoped mem for output reshape']
    #allocation1 [shape = 'u8[4096]{0}', space=vmem, size = 0x1000, scoped, tag = 'scoped mem for input reshape']
    %s3 = ssub.s32 16, 1
    %v4 = vld [vmem:[%s0] sm:%s3]
    %5 = vst [vmem:[#allocation1] sm:%s3] %v4
    %v6 = vld [vmem:[#allocation1] sm:$0x1]
    %vm7 = vcmask 23552
    %8 = vst.msk [vmem:[#allocation0] sm:$0x1] %vm7, %v6
    %s9 = scalar_lea.vmem [#allocation1], 3
    %v10 = vld [vmem:[%s9] sm:$0x1]
    %11 = vrot.lane.b32.xlu0 %v10, 9
    %v12 = vpop.permute.xlu0 %11
    %vm13 = vcmask 97352
    %14 = vst.msk [vmem:[#allocation0] sm:$0x1] %vm13, %v12
    %s15 = scalar_lea.vmem [#allocation1], 2
    %v16 = vld [vmem:[%s15] sm:$0x1]
    %17 = vrot.lane.b32.xlu0 %v16, 6
    %v18 = vpop.permute.xlu0 %17
    %vm19 = vcmask 72752
    %20 = vst.msk [vmem:[#allocation0] sm:$0x1] %vm19, %v18
    %s21 = scalar_lea.vmem [#allocation1], 1
    %v22 = vld [vmem:[%s21] sm:$0x1]
    %23 = vrot.lane.b32.xlu0 %v22, 3
    %v24 = vpop.permute.xlu0 %23
    %vm25 = vcmask 48152
    %26 = vst.msk [vmem:[#allocation0] sm:$0x1] %vm25, %v24
    %s28 = ssub.s32 2, 1
    %v29 = vld [vmem:[#allocation0] sm:%s28]
    %s31 = ssub.s32 2, 1
    %32 = vst [vmem:[%s1] sm:%s31] %v29

// kernel: autoencoder_forward.7
$region0: #{autoencoder_forward.7}
  #allocation0 [shape = 'u32[]', space=smem, size = 0x4, offset = 0x4, fixed_abs, tag = 'smem constant byte address 0x4 - core index']
  #allocation1 [shape = 'u32[72,128]{1,0:T(1,128)}', space=vmem, size = 0x9000, scoped, tag = 'internal scratch']
  %s0 = inlined_call_operand.vmem [shape: bf16[128,640], index: 0, kind: input, shape index: {}]
  %s1 = inlined_call_operand.vmem [shape: bf16[640,128], index: 1, kind: input, shape index: {}]
  %s2 = inlined_call_operand.vmem [shape: f32[1,128], index: 2, kind: input, shape index: {}]
  %s3 = inlined_call_operand.vmem [shape: f32[128,128], index: 3, kind: output, shape index: {}]
  %s4 = sld [smem:[#allocation0]]
  $region22: #{autoencoder_forward.7} parent=0
    _
  %s6 = ssub.s32 1, %s4
  %s7 = scalar_select 0, %s6, %s4
  // Predicated region
  $region2: #{autoencoder_forward.7} parent=0 // pred_check
    _
  $region3: #{autoencoder_forward.7} parent=0 // pred_check_branch
    %9 = sbr.rel (0) target = $region5
  $region4: #{autoencoder_forward.7} parent=0 // pred_region
    _
  $region5: #{autoencoder_forward.7} parent=0 // pred_fallthru
    _
  // Predicated region
  $region6: #{autoencoder_forward.7} parent=0 // pred_check
    _
  $region7: #{autoencoder_forward.7} parent=0 // pred_check_branch
    %11 = sbr.rel (0) target = $region9
  $region8: #{autoencoder_forward.7} parent=0 // pred_region
    _
  $region9: #{autoencoder_forward.7} parent=0 // pred_fallthru
    _
  // Predicated region
  $region10: #{autoencoder_forward.7} parent=0 // pred_check
    _
  $region11: #{autoencoder_forward.7} parent=0 // pred_check_branch
    %13 = sbr.rel (0) target = $region13
  $region12: #{autoencoder_forward.7} parent=0 // pred_region
    _
  $region13: #{autoencoder_forward.7} parent=0 // pred_fallthru
    _
  %v14 = vld [vmem:[%s0] sm:$0xff]
  %v15 = vld [vmem:[%s0 + $0x8] sm:$0xff]
  %v16 = vld [vmem:[%s0 + $0x10] sm:$0xf]
  %v17 = vld [vmem:[%s0 + $0x14] sm:$0xff]
  %v18 = vld [vmem:[%s0 + $0x1c] sm:$0xff]
  %v19 = vld [vmem:[%s0 + $0x24] sm:$0xf]
  %v20 = vld [vmem:[%s0 + $0x28] sm:$0xff]
  %v21 = vld [vmem:[%s0 + $0x30] sm:$0xff]
  %v22 = vld [vmem:[%s0 + $0x38] sm:$0xf]
  %v23 = vld [vmem:[%s0 + $0x3c] sm:$0xff]
  %v24 = vld [vmem:[%s0 + $0x44] sm:$0xff]
  %v25 = vld [vmem:[%s0 + $0x4c] sm:$0xf]
  %v26 = vld [vmem:[%s0 + $0x50] sm:$0xff]
  %v27 = vld [vmem:[%s0 + $0x58] sm:$0xff]
  %v28 = vld [vmem:[%s0 + $0x60] sm:$0xf]
  %v29 = vld [vmem:[%s0 + $0x64] sm:$0xff]
  %v30 = vld [vmem:[%s0 + $0x6c] sm:$0xff]
  %v31 = vld [vmem:[%s0 + $0x74] sm:$0xf]
  %v32 = vld [vmem:[%s0 + $0x78] sm:$0xff]
  %v33 = vld [vmem:[%s0 + $0x80] sm:$0xff]
  %v34 = vld [vmem:[%s0 + $0x88] sm:$0xf]
  %v35 = vld [vmem:[%s0 + $0x8c] sm:$0xff]
  %v36 = vld [vmem:[%s0 + $0x94] sm:$0xff]
  %v37 = vld [vmem:[%s0 + $0x9c] sm:$0xf]
  %v38 = vld [vmem:[%s0 + $0xa0] sm:$0xff]
  %v39 = vld [vmem:[%s0 + $0xa8] sm:$0xff]
  %v40 = vld [vmem:[%s0 + $0xb0] sm:$0xf]
  %v41 = vld [vmem:[%s0 + $0xb4] sm:$0xff]
  %v42 = vld [vmem:[%s0 + $0xbc] sm:$0xff]
  %v43 = vld [vmem:[%s0 + $0xc4] sm:$0xf]
  %v44 = vld [vmem:[%s0 + $0xc8] sm:$0xff]
  %v45 = vld [vmem:[%s0 + $0xd0] sm:$0xff]
  %v46 = vld [vmem:[%s0 + $0xd8] sm:$0xf]
  %v47 = vld [vmem:[%s0 + $0xdc] sm:$0xff]
  %v48 = vld [vmem:[%s0 + $0xe4] sm:$0xff]
  %v49 = vld [vmem:[%s0 + $0xec] sm:$0xf]
  %v50 = vld [vmem:[%s0 + $0xf0] sm:$0xff]
  %v51 = vld [vmem:[%s0 + $0xf8] sm:$0xff]
  %v52 = vld [vmem:[%s0 + $0x100] sm:$0xf]
  %v53 = vld [vmem:[%s0 + $0x104] sm:$0xff]
  %v54 = vld [vmem:[%s0 + $0x10c] sm:$0xff]
  %v55 = vld [vmem:[%s0 + $0x114] sm:$0xf]
  %v56 = vld [vmem:[%s0 + $0x118] sm:$0xff]
  %v57 = vld [vmem:[%s0 + $0x120] sm:$0xff]
  %v58 = vld [vmem:[%s0 + $0x128] sm:$0xf]
  %v59 = vld [vmem:[%s0 + $0x12c] sm:$0xff]
  %v60 = vld [vmem:[%s0 + $0x134] sm:$0xff]
  %v61 = vld [vmem:[%s0 + $0x13c] sm:$0xf]
  %v62 = vld [vmem:[%s1] sm:$0xf]
  %v63 = vld [vmem:[%s1 + $0x4] sm:$0xf]
  %v64 = vld [vmem:[%s1 + $0x8] sm:$0xf]
  %v65 = vld [vmem:[%s1 + $0xc] sm:$0xf]
  %v66 = vld [vmem:[%s1 + $0x10] sm:$0xf]
  %v67 = vld [vmem:[%s1 + $0x14] sm:$0xf]
  %v68 = vld [vmem:[%s1 + $0x18] sm:$0xf]
  %v69 = vld [vmem:[%s1 + $0x1c] sm:$0xf]
  %v70 = vld [vmem:[%s1 + $0x20] sm:$0xf]
  %v71 = vld [vmem:[%s1 + $0x24] sm:$0xf]
  %v72 = vld [vmem:[%s1 + $0x28] sm:$0xf]
  %v73 = vld [vmem:[%s1 + $0x2c] sm:$0xf]
  %v74 = vld [vmem:[%s1 + $0x30] sm:$0xf]
  %v75 = vld [vmem:[%s1 + $0x34] sm:$0xf]
  %v76 = vld [vmem:[%s1 + $0x38] sm:$0xf]
  %v77 = vld [vmem:[%s1 + $0x3c] sm:$0xf]
  %v78 = vld [vmem:[%s1 + $0x40] sm:$0xf]
  %v79 = vld [vmem:[%s1 + $0x44] sm:$0xf]
  %v80 = vld [vmem:[%s1 + $0x48] sm:$0xf]
  %v81 = vld [vmem:[%s1 + $0x4c] sm:$0xf]
  %v82 = vld [vmem:[%s1 + $0x50] sm:$0xf]
  %v83 = vld [vmem:[%s1 + $0x54] sm:$0xf]
  %v84 = vld [vmem:[%s1 + $0x58] sm:$0xf]
  %v85 = vld [vmem:[%s1 + $0x5c] sm:$0xf]
  %v86 = vld [vmem:[%s1 + $0x60] sm:$0xf]
  %v87 = vld [vmem:[%s1 + $0x64] sm:$0xf]
  %v88 = vld [vmem:[%s1 + $0x68] sm:$0xf]
  %v89 = vld [vmem:[%s1 + $0x6c] sm:$0xf]
  %v90 = vld [vmem:[%s1 + $0x70] sm:$0xf]
  %v91 = vld [vmem:[%s1 + $0x74] sm:$0xf]
  %v92 = vld [vmem:[%s1 + $0x78] sm:$0xf]
  %v93 = vld [vmem:[%s1 + $0x7c] sm:$0xf]
  %v94 = vld [vmem:[%s1 + $0x80] sm:$0xf]
  %v95 = vld [vmem:[%s1 + $0x84] sm:$0xf]
  %v96 = vld [vmem:[%s1 + $0x88] sm:$0xf]
  %v97 = vld [vmem:[%s1 + $0x8c] sm:$0xf]
  %v98 = vld [vmem:[%s1 + $0x90] sm:$0xf]
  %v99 = vld [vmem:[%s1 + $0x94] sm:$0xf]
  %v100 = vld [vmem:[%s1 + $0x98] sm:$0xf]
  %v101 = vld [vmem:[%s1 + $0x9c] sm:$0xf]
  %v102 = vld [vmem:[%s1 + $0xa0] sm:$0xf]
  %v103 = vld [vmem:[%s1 + $0xa4] sm:$0xf]
  %v104 = vld [vmem:[%s1 + $0xa8] sm:$0xf]
  %v105 = vld [vmem:[%s1 + $0xac] sm:$0xf]
  %v106 = vld [vmem:[%s1 + $0xb0] sm:$0xf]
  %v107 = vld [vmem:[%s1 + $0xb4] sm:$0xf]
  %v108 = vld [vmem:[%s1 + $0xb8] sm:$0xf]
  %v109 = vld [vmem:[%s1 + $0xbc] sm:$0xf]
  %v110 = vld [vmem:[%s1 + $0xc0] sm:$0xf]
  %v111 = vld [vmem:[%s1 + $0xc4] sm:$0xf]
  %v112 = vld [vmem:[%s1 + $0xc8] sm:$0xf]
  %v113 = vld [vmem:[%s1 + $0xcc] sm:$0xf]
  %v114 = vld [vmem:[%s1 + $0xd0] sm:$0xf]
  %v115 = vld [vmem:[%s1 + $0xd4] sm:$0xf]
  %v116 = vld [vmem:[%s1 + $0xd8] sm:$0xf]
  %v117 = vld [vmem:[%s1 + $0xdc] sm:$0xf]
  %v118 = vld [vmem:[%s1 + $0xe0] sm:$0xf]
  %v119 = vld [vmem:[%s1 + $0xe4] sm:$0xf]
  %v120 = vld [vmem:[%s1 + $0xe8] sm:$0xf]
  %v121 = vld [vmem:[%s1 + $0xec] sm:$0xf]
  %v122 = vld [vmem:[%s1 + $0xf0] sm:$0xf]
  %v123 = vld [vmem:[%s1 + $0xf4] sm:$0xf]
  %v124 = vld [vmem:[%s1 + $0xf8] sm:$0xf]
  %v125 = vld [vmem:[%s1 + $0xfc] sm:$0xf]
  %v126 = vld [vmem:[%s1 + $0x100] sm:$0xf]
  %v127 = vld [vmem:[%s1 + $0x104] sm:$0xf]
  %v128 = vld [vmem:[%s1 + $0x108] sm:$0xf]
  %v129 = vld [vmem:[%s1 + $0x10c] sm:$0xf]
  %v130 = vld [vmem:[%s1 + $0x110] sm:$0xf]
  %v131 = vld [vmem:[%s1 + $0x114] sm:$0xf]
  %v132 = vld [vmem:[%s1 + $0x118] sm:$0xf]
  %v133 = vld [vmem:[%s1 + $0x11c] sm:$0xf]
  %v134 = vld [vmem:[%s1 + $0x120] sm:$0xf]
  %v135 = vld [vmem:[%s1 + $0x124] sm:$0xf]
  %v136 = vld [vmem:[%s1 + $0x128] sm:$0xf]
  %v137 = vld [vmem:[%s1 + $0x12c] sm:$0xf]
  %v138 = vld [vmem:[%s1 + $0x130] sm:$0xf]
  %v139 = vld [vmem:[%s1 + $0x134] sm:$0xf]
  %v140 = vld [vmem:[%s1 + $0x138] sm:$0xf]
  %v141 = vld [vmem:[%s1 + $0x13c] sm:$0xf]
  %v142 = vld [vmem:[%s2] sm:$0x1]
  %v144 = vperm.slane %v142, 0
  %v194 = vunpack.c.l.b16 %v14
  %v195 = vunpack.c.h.b16 %v14
  %v196 = vunpack.c.l.b16 %v15
  %v197 = vunpack.c.h.b16 %v15
  %v198 = vunpack.c.l.b16 %v16
  %v199 = vunpack.c.l.b16 %v17
  %v200 = vunpack.c.h.b16 %v17
  %v201 = vunpack.c.l.b16 %v18
  %v202 = vunpack.c.h.b16 %v18
  %v203 = vunpack.c.l.b16 %v19
  %v204 = vunpack.c.l.b16 %v20
  %v205 = vunpack.c.h.b16 %v20
  %v206 = vunpack.c.l.b16 %v21
  %v207 = vunpack.c.h.b16 %v21
  %v208 = vunpack.c.l.b16 %v22
  %v209 = vunpack.c.l.b16 %v23
  %v210 = vunpack.c.h.b16 %v23
  %v211 = vunpack.c.l.b16 %v24
  %v212 = vunpack.c.h.b16 %v24
  %v213 = vunpack.c.l.b16 %v25
  %v214 = vunpack.c.l.b16 %v26
  %v215 = vunpack.c.h.b16 %v26
  %v216 = vunpack.c.l.b16 %v27
  %v217 = vunpack.c.h.b16 %v27
  %v218 = vunpack.c.l.b16 %v28
  %v219 = vunpack.c.l.b16 %v29
  %v220 = vunpack.c.h.b16 %v29
  %v221 = vunpack.c.l.b16 %v30
  %v222 = vunpack.c.h.b16 %v30
  %v223 = vunpack.c.l.b16 %v31
  %v224 = vunpack.c.l.b16 %v32
  %v225 = vunpack.c.h.b16 %v32
  %v226 = vunpack.c.l.b16 %v33
  %v227 = vunpack.c.h.b16 %v33
  %v228 = vunpack.c.l.b16 %v34
  %v229 = vunpack.c.l.b16 %v35
  %v230 = vunpack.c.h.b16 %v35
  %v231 = vunpack.c.l.b16 %v36
  %v232 = vunpack.c.h.b16 %v36
  %v233 = vunpack.c.l.b16 %v37
  %v234 = vunpack.c.l.b16 %v38
  %v235 = vunpack.c.h.b16 %v38
  %v236 = vunpack.c.l.b16 %v39
  %v237 = vunpack.c.h.b16 %v39
  %v238 = vunpack.c.l.b16 %v40
  %v239 = vunpack.c.l.b16 %v41
  %v240 = vunpack.c.h.b16 %v41
  %v241 = vunpack.c.l.b16 %v42
  %v242 = vunpack.c.h.b16 %v42
  %v243 = vunpack.c.l.b16 %v43
  %v244 = vunpack.c.l.b16 %v44
  %v245 = vunpack.c.h.b16 %v44
  %v246 = vunpack.c.l.b16 %v45
  %v247 = vunpack.c.h.b16 %v45
  %v248 = vunpack.c.l.b16 %v46
  %v249 = vunpack.c.l.b16 %v47
  %v250 = vunpack.c.h.b16 %v47
  %v251 = vunpack.c.l.b16 %v48
  %v252 = vunpack.c.h.b16 %v48
  %v253 = vunpack.c.l.b16 %v49
  %v254 = vunpack.c.l.b16 %v50
  %v255 = vunpack.c.h.b16 %v50
  %v256 = vunpack.c.l.b16 %v51
  %v257 = vunpack.c.h.b16 %v51
  %v258 = vunpack.c.l.b16 %v52
  %v259 = vunpack.c.l.b16 %v53
  %v260 = vunpack.c.h.b16 %v53
  %v261 = vunpack.c.l.b16 %v54
  %v262 = vunpack.c.h.b16 %v54
  %v263 = vunpack.c.l.b16 %v55
  %v264 = vunpack.c.l.b16 %v56
  %v265 = vunpack.c.h.b16 %v56
  %v266 = vunpack.c.l.b16 %v57
  %v267 = vunpack.c.h.b16 %v57
  %v268 = vunpack.c.l.b16 %v58
  %v269 = vunpack.c.l.b16 %v59
  %v270 = vunpack.c.h.b16 %v59
  %v271 = vunpack.c.l.b16 %v60
  %v272 = vunpack.c.h.b16 %v60
  %v273 = vunpack.c.l.b16 %v61
  %v274 = vpack.c.b16 %v199, %v194
  %v275 = vpack.c.b16 %v200, %v195
  %v276 = vpack.c.b16 %v201, %v196
  %v277 = vpack.c.b16 %v202, %v197
  %v278 = vpack.c.b16 %v203, %v198
  %v279 = vpack.c.b16 %v209, %v204
  %v280 = vpack.c.b16 %v210, %v205
  %v281 = vpack.c.b16 %v211, %v206
  %v282 = vpack.c.b16 %v212, %v207
  %v283 = vpack.c.b16 %v213, %v208
  %v284 = vpack.c.b16 %v219, %v214
  %v285 = vpack.c.b16 %v220, %v215
  %v286 = vpack.c.b16 %v221, %v216
  %v287 = vpack.c.b16 %v222, %v217
  %v288 = vpack.c.b16 %v223, %v218
  %v289 = vpack.c.b16 %v229, %v224
  %v290 = vpack.c.b16 %v230, %v225
  %v291 = vpack.c.b16 %v231, %v226
  %v292 = vpack.c.b16 %v232, %v227
  %v293 = vpack.c.b16 %v233, %v228
  %v294 = vpack.c.b16 %v239, %v234
  %v295 = vpack.c.b16 %v240, %v235
  %v296 = vpack.c.b16 %v241, %v236
  %v297 = vpack.c.b16 %v242, %v237
  %v298 = vpack.c.b16 %v243, %v238
  %v299 = vpack.c.b16 %v249, %v244
  %v300 = vpack.c.b16 %v250, %v245
  %v301 = vpack.c.b16 %v251, %v246
  %v302 = vpack.c.b16 %v252, %v247
  %v303 = vpack.c.b16 %v253, %v248
  %v304 = vpack.c.b16 %v259, %v254
  %v305 = vpack.c.b16 %v260, %v255
  %v306 = vpack.c.b16 %v261, %v256
  %v307 = vpack.c.b16 %v262, %v257
  %v308 = vpack.c.b16 %v263, %v258
  %v309 = vpack.c.b16 %v269, %v264
  %v310 = vpack.c.b16 %v270, %v265
  %v311 = vpack.c.b16 %v271, %v266
  %v312 = vpack.c.b16 %v272, %v267
  %v313 = vpack.c.b16 %v273, %v268
  %v434 = vunpack.c.l.b16 %v62
  %v435 = vunpack.c.l.b16 %v63
  %v436 = vunpack.c.l.b16 %v64
  %v437 = vunpack.c.l.b16 %v65
  %v438 = vunpack.c.l.b16 %v66
  %v439 = vunpack.c.l.b16 %v67
  %v440 = vunpack.c.l.b16 %v68
  %v441 = vunpack.c.l.b16 %v69
  %v442 = vunpack.c.l.b16 %v70
  %v443 = vunpack.c.l.b16 %v71
  %v444 = vunpack.c.l.b16 %v72
  %v445 = vunpack.c.l.b16 %v73
  %v446 = vunpack.c.l.b16 %v74
  %v447 = vunpack.c.l.b16 %v75
  %v448 = vunpack.c.l.b16 %v76
  %v449 = vunpack.c.l.b16 %v77
  %v450 = vunpack.c.l.b16 %v78
  %v451 = vunpack.c.l.b16 %v79
  %v452 = vunpack.c.l.b16 %v80
  %v453 = vunpack.c.l.b16 %v81
  %v454 = vunpack.c.l.b16 %v82
  %v455 = vunpack.c.l.b16 %v83
  %v456 = vunpack.c.l.b16 %v84
  %v457 = vunpack.c.l.b16 %v85
  %v458 = vunpack.c.l.b16 %v86
  %v459 = vunpack.c.l.b16 %v87
  %v460 = vunpack.c.l.b16 %v88
  %v461 = vunpack.c.l.b16 %v89
  %v462 = vunpack.c.l.b16 %v90
  %v463 = vunpack.c.l.b16 %v91
  %v464 = vunpack.c.l.b16 %v92
  %v465 = vunpack.c.l.b16 %v93
  %v466 = vunpack.c.l.b16 %v94
  %v467 = vunpack.c.l.b16 %v95
  %v468 = vunpack.c.l.b16 %v96
  %v469 = vunpack.c.l.b16 %v97
  %v470 = vunpack.c.l.b16 %v98
  %v471 = vunpack.c.l.b16 %v99
  %v472 = vunpack.c.l.b16 %v100
  %v473 = vunpack.c.l.b16 %v101
  %v474 = vunpack.c.l.b16 %v102
  %v475 = vunpack.c.l.b16 %v103
  %v476 = vunpack.c.l.b16 %v104
  %v477 = vunpack.c.l.b16 %v105
  %v478 = vunpack.c.l.b16 %v106
  %v479 = vunpack.c.l.b16 %v107
  %v480 = vunpack.c.l.b16 %v108
  %v481 = vunpack.c.l.b16 %v109
  %v482 = vunpack.c.l.b16 %v110
  %v483 = vunpack.c.l.b16 %v111
  %v484 = vunpack.c.l.b16 %v112
  %v485 = vunpack.c.l.b16 %v113
  %v486 = vunpack.c.l.b16 %v114
  %v487 = vunpack.c.l.b16 %v115
  %v488 = vunpack.c.l.b16 %v116
  %v489 = vunpack.c.l.b16 %v117
  %v490 = vunpack.c.l.b16 %v118
  %v491 = vunpack.c.l.b16 %v119
  %v492 = vunpack.c.l.b16 %v120
  %v493 = vunpack.c.l.b16 %v121
  %v494 = vunpack.c.l.b16 %v122
  %v495 = vunpack.c.l.b16 %v123
  %v496 = vunpack.c.l.b16 %v124
  %v497 = vunpack.c.l.b16 %v125
  %v498 = vunpack.c.l.b16 %v126
  %v499 = vunpack.c.l.b16 %v127
  %v500 = vunpack.c.l.b16 %v128
  %v501 = vunpack.c.l.b16 %v129
  %v502 = vunpack.c.l.b16 %v130
  %v503 = vunpack.c.l.b16 %v131
  %v504 = vunpack.c.l.b16 %v132
  %v505 = vunpack.c.l.b16 %v133
  %v506 = vunpack.c.l.b16 %v134
  %v507 = vunpack.c.l.b16 %v135
  %v508 = vunpack.c.l.b16 %v136
  %v509 = vunpack.c.l.b16 %v137
  %v510 = vunpack.c.l.b16 %v138
  %v511 = vunpack.c.l.b16 %v139
  %v512 = vunpack.c.l.b16 %v140
  %v513 = vunpack.c.l.b16 %v141
  %v514 = vpack.c.b16 %v435, %v434
  %v515 = vpack.c.b16 %v437, %v436
  %v516 = vpack.c.b16 %v439, %v438
  %v517 = vpack.c.b16 %v441, %v440
  %v518 = vpack.c.b16 %v443, %v442
  %v519 = vpack.c.b16 %v445, %v444
  %v520 = vpack.c.b16 %v447, %v446
  %v521 = vpack.c.b16 %v449, %v448
  %v522 = vpack.c.b16 %v451, %v450
  %v523 = vpack.c.b16 %v453, %v452
  %v524 = vpack.c.b16 %v455, %v454
  %v525 = vpack.c.b16 %v457, %v456
  %v526 = vpack.c.b16 %v459, %v458
  %v527 = vpack.c.b16 %v461, %v460
  %v528 = vpack.c.b16 %v463, %v462
  %v529 = vpack.c.b16 %v465, %v464
  %v530 = vpack.c.b16 %v467, %v466
  %v531 = vpack.c.b16 %v469, %v468
  %v532 = vpack.c.b16 %v471, %v470
  %v533 = vpack.c.b16 %v473, %v472
  %v534 = vpack.c.b16 %v475, %v474
  %v535 = vpack.c.b16 %v477, %v476
  %v536 = vpack.c.b16 %v479, %v478
  %v537 = vpack.c.b16 %v481, %v480
  %v538 = vpack.c.b16 %v483, %v482
  %v539 = vpack.c.b16 %v485, %v484
  %v540 = vpack.c.b16 %v487, %v486
  %v541 = vpack.c.b16 %v489, %v488
  %v542 = vpack.c.b16 %v491, %v490
  %v543 = vpack.c.b16 %v493, %v492
  %v544 = vpack.c.b16 %v495, %v494
  %v545 = vpack.c.b16 %v497, %v496
  %v546 = vpack.c.b16 %v499, %v498
  %v547 = vpack.c.b16 %v501, %v500
  %v548 = vpack.c.b16 %v503, %v502
  %v549 = vpack.c.b16 %v505, %v504
  %v550 = vpack.c.b16 %v507, %v506
  %v551 = vpack.c.b16 %v509, %v508
  %v552 = vpack.c.b16 %v511, %v510
  %v553 = vpack.c.b16 %v513, %v512
  %594 = vmatpush.bf16.msra.mxu0 %v521
  %595 = vmatpush.bf16.msra.mxu0 %v520
  %596 = vmatpush.bf16.msra.mxu0 %v519
  %597 = vmatpush.bf16.msra.mxu0 %v518
  %598 = vmatpush.bf16.msra.mxu0 %v517
  %599 = vmatpush.bf16.msra.mxu0 %v516
  %600 = vmatpush.bf16.msra.mxu0 %v515
  %601 = vmatpush.bf16.msra.mxu0 %v514
  %602 = vmatmul.bf16.gmra.mxu0 %v274
  %v603 = vpop.f32.mrf.mxu0
  %v604 = vadd.f32 %v144, %v603
  %v605 = vpop.f32.mrf.mxu0
  %v606 = vadd.f32 %v144, %v605
  %607 = vmatmul.bf16.gmra.mxu0 %v279
  %v608 = vpop.f32.mrf.mxu0
  %v609 = vadd.f32 %v144, %v608
  %v610 = vpop.f32.mrf.mxu0
  %v611 = vadd.f32 %v144, %v610
  %612 = vmatmul.bf16.gmra.mxu0 %v284
  %v613 = vpop.f32.mrf.mxu0
  %v614 = vadd.f32 %v144, %v613
  %v615 = vpop.f32.mrf.mxu0
  %v616 = vadd.f32 %v144, %v615
  %617 = vmatmul.bf16.gmra.mxu0 %v289
  %v618 = vpop.f32.mrf.mxu0
  %v619 = vadd.f32 %v144, %v618
  %v620 = vpop.f32.mrf.mxu0
  %v621 = vadd.f32 %v144, %v620
  %622 = vmatmul.bf16.gmra.mxu0 %v294
  %v623 = vpop.f32.mrf.mxu0
  %v624 = vadd.f32 %v144, %v623
  %v625 = vpop.f32.mrf.mxu0
  %v626 = vadd.f32 %v144, %v625
  %627 = vmatmul.bf16.gmra.mxu0 %v299
  %v628 = vpop.f32.mrf.mxu0
  %v629 = vadd.f32 %v144, %v628
  %v630 = vpop.f32.mrf.mxu0
  %v631 = vadd.f32 %v144, %v630
  %632 = vmatmul.bf16.gmra.mxu0 %v304
  %v633 = vpop.f32.mrf.mxu0
  %v634 = vadd.f32 %v144, %v633
  %v635 = vpop.f32.mrf.mxu0
  %v636 = vadd.f32 %v144, %v635
  %637 = vmatmul.bf16.gmra.mxu0 %v309
  %v638 = vpop.f32.mrf.mxu0
  %v639 = vadd.f32 %v144, %v638
  %v640 = vpop.f32.mrf.mxu0
  %v641 = vadd.f32 %v144, %v640
  %642 = vdwg.mxu0
  %643 = vmatpush.bf16.msra.mxu0 %v529
  %644 = vmatpush.bf16.msra.mxu0 %v528
  %645 = vmatpush.bf16.msra.mxu0 %v527
  %646 = vmatpush.bf16.msra.mxu0 %v526
  %647 = vmatpush.bf16.msra.mxu0 %v525
  %648 = vmatpush.bf16.msra.mxu0 %v524
  %649 = vmatpush.bf16.msra.mxu0 %v523
  %650 = vmatpush.bf16.msra.mxu0 %v522
  %651 = vmatmul.bf16.gmra.mxu0 %v275
  %v652 = vpop.f32.mrf.mxu0
  %v653 = vadd.f32 %v604, %v652
  %v654 = vpop.f32.mrf.mxu0
  %v655 = vadd.f32 %v606, %v654
  %656 = vmatmul.bf16.gmra.mxu0 %v280
  %v657 = vpop.f32.mrf.mxu0
  %v658 = vadd.f32 %v609, %v657
  %v659 = vpop.f32.mrf.mxu0
  %v660 = vadd.f32 %v611, %v659
  %661 = vmatmul.bf16.gmra.mxu0 %v285
  %v662 = vpop.f32.mrf.mxu0
  %v663 = vadd.f32 %v614, %v662
  %v664 = vpop.f32.mrf.mxu0
  %v665 = vadd.f32 %v616, %v664
  %666 = vmatmul.bf16.gmra.mxu0 %v290
  %v667 = vpop.f32.mrf.mxu0
  %v668 = vadd.f32 %v619, %v667
  %v669 = vpop.f32.mrf.mxu0
  %v670 = vadd.f32 %v621, %v669
  %671 = vmatmul.bf16.gmra.mxu0 %v295
  %v672 = vpop.f32.mrf.mxu0
  %v673 = vadd.f32 %v624, %v672
  %v674 = vpop.f32.mrf.mxu0
  %v675 = vadd.f32 %v626, %v674
  %676 = vmatmul.bf16.gmra.mxu0 %v300
  %v677 = vpop.f32.mrf.mxu0
  %v678 = vadd.f32 %v629, %v677
  %v679 = vpop.f32.mrf.mxu0
  %v680 = vadd.f32 %v631, %v679
  %681 = vmatmul.bf16.gmra.mxu0 %v305
  %v682 = vpop.f32.mrf.mxu0
  %v683 = vadd.f32 %v634, %v682
  %v684 = vpop.f32.mrf.mxu0
  %v685 = vadd.f32 %v636, %v684
  %686 = vmatmul.bf16.gmra.mxu0 %v310
  %v687 = vpop.f32.mrf.mxu0
  %v688 = vadd.f32 %v639, %v687
  %v689 = vpop.f32.mrf.mxu0
  %v690 = vadd.f32 %v641, %v689
  %691 = vdwg.mxu0
  %692 = vmatpush.bf16.msra.mxu0 %v537
  %693 = vmatpush.bf16.msra.mxu0 %v536
  %694 = vmatpush.bf16.msra.mxu0 %v535
  %695 = vmatpush.bf16.msra.mxu0 %v534
  %696 = vmatpush.bf16.msra.mxu0 %v533
  %697 = vmatpush.bf16.msra.mxu0 %v532
  %698 = vmatpush.bf16.msra.mxu0 %v531
  %699 = vmatpush.bf16.msra.mxu0 %v530
  %700 = vmatmul.bf16.gmra.mxu0 %v276
  %v701 = vpop.f32.mrf.mxu0
  %v702 = vadd.f32 %v653, %v701
  %v703 = vpop.f32.mrf.mxu0
  %v704 = vadd.f32 %v655, %v703
  %705 = vmatmul.bf16.gmra.mxu0 %v281
  %v706 = vpop.f32.mrf.mxu0
  %v707 = vadd.f32 %v658, %v706
  %v708 = vpop.f32.mrf.mxu0
  %v709 = vadd.f32 %v660, %v708
  %710 = vmatmul.bf16.gmra.mxu0 %v286
  %v711 = vpop.f32.mrf.mxu0
  %v712 = vadd.f32 %v663, %v711
  %v713 = vpop.f32.mrf.mxu0
  %v714 = vadd.f32 %v665, %v713
  %715 = vmatmul.bf16.gmra.mxu0 %v291
  %v716 = vpop.f32.mrf.mxu0
  %v717 = vadd.f32 %v668, %v716
  %v718 = vpop.f32.mrf.mxu0
  %v719 = vadd.f32 %v670, %v718
  %720 = vmatmul.bf16.gmra.mxu0 %v296
  %v721 = vpop.f32.mrf.mxu0
  %v722 = vadd.f32 %v673, %v721
  %v723 = vpop.f32.mrf.mxu0
  %v724 = vadd.f32 %v675, %v723
  %725 = vmatmul.bf16.gmra.mxu0 %v301
  %v726 = vpop.f32.mrf.mxu0
  %v727 = vadd.f32 %v678, %v726
  %v728 = vpop.f32.mrf.mxu0
  %v729 = vadd.f32 %v680, %v728
  %730 = vmatmul.bf16.gmra.mxu0 %v306
  %v731 = vpop.f32.mrf.mxu0
  %v732 = vadd.f32 %v683, %v731
  %v733 = vpop.f32.mrf.mxu0
  %v734 = vadd.f32 %v685, %v733
  %735 = vmatmul.bf16.gmra.mxu0 %v311
  %v736 = vpop.f32.mrf.mxu0
  %v737 = vadd.f32 %v688, %v736
  %v738 = vpop.f32.mrf.mxu0
  %v739 = vadd.f32 %v690, %v738
  %740 = vdwg.mxu0
  %741 = vmatpush.bf16.msra.mxu0 %v545
  %742 = vmatpush.bf16.msra.mxu0 %v544
  %743 = vmatpush.bf16.msra.mxu0 %v543
  %744 = vmatpush.bf16.msra.mxu0 %v542
  %745 = vmatpush.bf16.msra.mxu0 %v541
  %746 = vmatpush.bf16.msra.mxu0 %v540
  %747 = vmatpush.bf16.msra.mxu0 %v539
  %748 = vmatpush.bf16.msra.mxu0 %v538
  %749 = vmatmul.bf16.gmra.mxu0 %v277
  %v750 = vpop.f32.mrf.mxu0
  %v751 = vadd.f32 %v702, %v750
  %v752 = vpop.f32.mrf.mxu0
  %v753 = vadd.f32 %v704, %v752
  %754 = vmatmul.bf16.gmra.mxu0 %v282
  %v755 = vpop.f32.mrf.mxu0
  %v756 = vadd.f32 %v707, %v755
  %v757 = vpop.f32.mrf.mxu0
  %v758 = vadd.f32 %v709, %v757
  %759 = vmatmul.bf16.gmra.mxu0 %v287
  %v760 = vpop.f32.mrf.mxu0
  %v761 = vadd.f32 %v712, %v760
  %v762 = vpop.f32.mrf.mxu0
  %v763 = vadd.f32 %v714, %v762
  %764 = vmatmul.bf16.gmra.mxu0 %v292
  %v765 = vpop.f32.mrf.mxu0
  %v766 = vadd.f32 %v717, %v765
  %v767 = vpop.f32.mrf.mxu0
  %v768 = vadd.f32 %v719, %v767
  %769 = vmatmul.bf16.gmra.mxu0 %v297
  %v770 = vpop.f32.mrf.mxu0
  %v771 = vadd.f32 %v722, %v770
  %v772 = vpop.f32.mrf.mxu0
  %v773 = vadd.f32 %v724, %v772
  %774 = vmatmul.bf16.gmra.mxu0 %v302
  %v775 = vpop.f32.mrf.mxu0
  %v776 = vadd.f32 %v727, %v775
  %v777 = vpop.f32.mrf.mxu0
  %v778 = vadd.f32 %v729, %v777
  %779 = vmatmul.bf16.gmra.mxu0 %v307
  %v780 = vpop.f32.mrf.mxu0
  %v781 = vadd.f32 %v732, %v780
  %v782 = vpop.f32.mrf.mxu0
  %v783 = vadd.f32 %v734, %v782
  %784 = vmatmul.bf16.gmra.mxu0 %v312
  %v785 = vpop.f32.mrf.mxu0
  %v786 = vadd.f32 %v737, %v785
  %v787 = vpop.f32.mrf.mxu0
  %v788 = vadd.f32 %v739, %v787
  %789 = vdwg.mxu0
  %790 = vmatpush.bf16.msra.mxu0 %v553
  %791 = vmatpush.bf16.msra.mxu0 %v552
  %792 = vmatpush.bf16.msra.mxu0 %v551
  %793 = vmatpush.bf16.msra.mxu0 %v550
  %794 = vmatpush.bf16.msra.mxu0 %v549
  %795 = vmatpush.bf16.msra.mxu0 %v548
  %796 = vmatpush.bf16.msra.mxu0 %v547
  %797 = vmatpush.bf16.msra.mxu0 %v546
  %798 = vmatmul.bf16.gmra.mxu0 %v278
  %v799 = vpop.f32.mrf.mxu0
  %v800 = vadd.f32 %v751, %v799
  %v801 = vpop.f32.mrf.mxu0
  %v802 = vadd.f32 %v753, %v801
  %803 = vmatmul.bf16.gmra.mxu0 %v283
  %v804 = vpop.f32.mrf.mxu0
  %v805 = vadd.f32 %v756, %v804
  %v806 = vpop.f32.mrf.mxu0
  %v807 = vadd.f32 %v758, %v806
  %808 = vmatmul.bf16.gmra.mxu0 %v288
  %v809 = vpop.f32.mrf.mxu0
  %v810 = vadd.f32 %v761, %v809
  %v811 = vpop.f32.mrf.mxu0
  %v812 = vadd.f32 %v763, %v811
  %813 = vmatmul.bf16.gmra.mxu0 %v293
  %v814 = vpop.f32.mrf.mxu0
  %v815 = vadd.f32 %v766, %v814
  %v816 = vpop.f32.mrf.mxu0
  %v817 = vadd.f32 %v768, %v816
  %818 = vmatmul.bf16.gmra.mxu0 %v298
  %v819 = vpop.f32.mrf.mxu0
  %v820 = vadd.f32 %v771, %v819
  %v821 = vpop.f32.mrf.mxu0
  %v822 = vadd.f32 %v773, %v821
  %823 = vmatmul.bf16.gmra.mxu0 %v303
  %v824 = vpop.f32.mrf.mxu0
  %v825 = vadd.f32 %v776, %v824
  %v826 = vpop.f32.mrf.mxu0
  %v827 = vadd.f32 %v778, %v826
  %828 = vmatmul.bf16.gmra.mxu0 %v308
  %v829 = vpop.f32.mrf.mxu0
  %v830 = vadd.f32 %v781, %v829
  %v831 = vpop.f32.mrf.mxu0
  %v832 = vadd.f32 %v783, %v831
  %833 = vmatmul.bf16.gmra.mxu0 %v313
  %v834 = vpop.f32.mrf.mxu0
  %v835 = vadd.f32 %v786, %v834
  %v836 = vpop.f32.mrf.mxu0
  %v837 = vadd.f32 %v788, %v836
  %838 = vdwg.mxu0
  %v839 = vxor.u32 %v800, 2147483648
  %v840 = vxor.u32 %v802, 2147483648
  %v841 = vxor.u32 %v805, 2147483648
  %v842 = vxor.u32 %v807, 2147483648
  %v843 = vxor.u32 %v810, 2147483648
  %v844 = vxor.u32 %v812, 2147483648
  %v845 = vxor.u32 %v815, 2147483648
  %v846 = vxor.u32 %v817, 2147483648
  %v847 = vxor.u32 %v820, 2147483648
  %v848 = vxor.u32 %v822, 2147483648
  %v849 = vxor.u32 %v825, 2147483648
  %v850 = vxor.u32 %v827, 2147483648
  %v851 = vxor.u32 %v830, 2147483648
  %v852 = vxor.u32 %v832, 2147483648
  %v853 = vxor.u32 %v835, 2147483648
  %v854 = vxor.u32 %v837, 2147483648
  %v855 = vmul.f32 %v839, 1.442695
  %v856 = vpow.pop %v855
  %v857 = vmul.f32 %v840, 1.442695
  %v858 = vpow.pop %v857
  %v859 = vmul.f32 %v841, 1.442695
  %v860 = vpow.pop %v859
  %v861 = vmul.f32 %v842, 1.442695
  %v862 = vpow.pop %v861
  %v863 = vmul.f32 %v843, 1.442695
  %v864 = vpow.pop %v863
  %v865 = vmul.f32 %v844, 1.442695
  %v866 = vpow.pop %v865
  %v867 = vmul.f32 %v845, 1.442695
  %v868 = vpow.pop %v867
  %v869 = vmul.f32 %v846, 1.442695
  %v870 = vpow.pop %v869
  %v871 = vmul.f32 %v847, 1.442695
  %v872 = vpow.pop %v871
  %v873 = vmul.f32 %v848, 1.442695
  %v874 = vpow.pop %v873
  %v875 = vmul.f32 %v849, 1.442695
  %v876 = vpow.pop %v875
  %v877 = vmul.f32 %v850, 1.442695
  %v878 = vpow.pop %v877
  %v879 = vmul.f32 %v851, 1.442695
  %v880 = vpow.pop %v879
  %v881 = vmul.f32 %v852, 1.442695
  %v882 = vpow.pop %v881
  %v883 = vmul.f32 %v853, 1.442695
  %v884 = vpow.pop %v883
  %v885 = vmul.f32 %v854, 1.442695
  %v886 = vpow.pop %v885
  %v887 = vadd.f32 %v856, 1.0
  %v888 = vadd.f32 %v858, 1.0
  %v889 = vadd.f32 %v860, 1.0
  %v890 = vadd.f32 %v862, 1.0
  %v891 = vadd.f32 %v864, 1.0
  %v892 = vadd.f32 %v866, 1.0
  %v893 = vadd.f32 %v868, 1.0
  %v894 = vadd.f32 %v870, 1.0
  %v895 = vadd.f32 %v872, 1.0
  %v896 = vadd.f32 %v874, 1.0
  %v897 = vadd.f32 %v876, 1.0
  %v898 = vadd.f32 %v878, 1.0
  %v899 = vadd.f32 %v880, 1.0
  %v900 = vadd.f32 %v882, 1.0
  %v901 = vadd.f32 %v884, 1.0
  %v902 = vadd.f32 %v886, 1.0
  %v903 = vrcp.pop %v887
  %v904 = vmul.f32 %v887, %v903
  %v905 = vsub.f32 1.0, %v904
  %v906 = vmul.f32 %v903, %v905
  %v907 = vadd.f32 %v903, %v906
  %vm908 = vweird.f32 %v887
  %vm909 = vweird.f32 %v903
  %vm910 = vmor %vm908, %vm909
  %v911 = vsel %vm910, %v903, %v907
  %v912 = vand.u32 2147483647, %v887
  %vm913 = vcmp.eq.f32.partialorder %v912, 8.507059e+37
  %v914 = vand.u32 %v887, 2147483648
  %v915 = vor.u32 1.1754944e-38, %v914
  %v916 = vsel %vm913, %v915, %v911
  %v917 = vmul.f32 1.0, %v916
  %v918 = vrcp.pop %v888
  %v919 = vmul.f32 %v888, %v918
  %v920 = vsub.f32 1.0, %v919
  %v921 = vmul.f32 %v918, %v920
  %v922 = vadd.f32 %v918, %v921
  %vm923 = vweird.f32 %v888
  %vm924 = vweird.f32 %v918
  %vm925 = vmor %vm923, %vm924
  %v926 = vsel %vm925, %v918, %v922
  %v927 = vand.u32 2147483647, %v888
  %vm928 = vcmp.eq.f32.partialorder %v927, 8.507059e+37
  %v929 = vand.u32 %v888, 2147483648
  %v930 = vor.u32 1.1754944e-38, %v929
  %v931 = vsel %vm928, %v930, %v926
  %v932 = vmul.f32 1.0, %v931
  %v933 = vrcp.pop %v889
  %v934 = vmul.f32 %v889, %v933
  %v935 = vsub.f32 1.0, %v934
  %v936 = vmul.f32 %v933, %v935
  %v937 = vadd.f32 %v933, %v936
  %vm938 = vweird.f32 %v889
  %vm939 = vweird.f32 %v933
  %vm940 = vmor %vm938, %vm939
  %v941 = vsel %vm940, %v933, %v937
  %v942 = vand.u32 2147483647, %v889
  %vm943 = vcmp.eq.f32.partialorder %v942, 8.507059e+37
  %v944 = vand.u32 %v889, 2147483648
  %v945 = vor.u32 1.1754944e-38, %v944
  %v946 = vsel %vm943, %v945, %v941
  %v947 = vmul.f32 1.0, %v946
  %v948 = vrcp.pop %v890
  %v949 = vmul.f32 %v890, %v948
  %v950 = vsub.f32 1.0, %v949
  %v951 = vmul.f32 %v948, %v950
  %v952 = vadd.f32 %v948, %v951
  %vm953 = vweird.f32 %v890
  %vm954 = vweird.f32 %v948
  %vm955 = vmor %vm953, %vm954
  %v956 = vsel %vm955, %v948, %v952
  %v957 = vand.u32 2147483647, %v890
  %vm958 = vcmp.eq.f32.partialorder %v957, 8.507059e+37
  %v959 = vand.u32 %v890, 2147483648
  %v960 = vor.u32 1.1754944e-38, %v959
  %v961 = vsel %vm958, %v960, %v956
  %v962 = vmul.f32 1.0, %v961
  %v963 = vrcp.pop %v891
  %v964 = vmul.f32 %v891, %v963
  %v965 = vsub.f32 1.0, %v964
  %v966 = vmul.f32 %v963, %v965
  %v967 = vadd.f32 %v963, %v966
  %vm968 = vweird.f32 %v891
  %vm969 = vweird.f32 %v963
  %vm970 = vmor %vm968, %vm969
  %v971 = vsel %vm970, %v963, %v967
  %v972 = vand.u32 2147483647, %v891
  %vm973 = vcmp.eq.f32.partialorder %v972, 8.507059e+37
  %v974 = vand.u32 %v891, 2147483648
  %v975 = vor.u32 1.1754944e-38, %v974
  %v976 = vsel %vm973, %v975, %v971
  %v977 = vmul.f32 1.0, %v976
  %v978 = vrcp.pop %v892
  %v979 = vmul.f32 %v892, %v978
  %v980 = vsub.f32 1.0, %v979
  %v981 = vmul.f32 %v978, %v980
  %v982 = vadd.f32 %v978, %v981
  %vm983 = vweird.f32 %v892
  %vm984 = vweird.f32 %v978
  %vm985 = vmor %vm983, %vm984
  %v986 = vsel %vm985, %v978, %v982
  %v987 = vand.u32 2147483647, %v892
  %vm988 = vcmp.eq.f32.partialorder %v987, 8.507059e+37
  %v989 = vand.u32 %v892, 2147483648
  %v990 = vor.u32 1.1754944e-38, %v989
  %v991 = vsel %vm988, %v990, %v986
  %v992 = vmul.f32 1.0, %v991
  %v993 = vrcp.pop %v893
  %v994 = vmul.f32 %v893, %v993
  %v995 = vsub.f32 1.0, %v994
  %v996 = vmul.f32 %v993, %v995
  %v997 = vadd.f32 %v993, %v996
  %vm998 = vweird.f32 %v893
  %vm999 = vweird.f32 %v993
  %vm1000 = vmor %vm998, %vm999
  %v1001 = vsel %vm1000, %v993, %v997
  %v1002 = vand.u32 2147483647, %v893
  %vm1003 = vcmp.eq.f32.partialorder %v1002, 8.507059e+37
  %v1004 = vand.u32 %v893, 2147483648
  %v1005 = vor.u32 1.1754944e-38, %v1004
  %v1006 = vsel %vm1003, %v1005, %v1001
  %v1007 = vmul.f32 1.0, %v1006
  %v1008 = vrcp.pop %v894
  %v1009 = vmul.f32 %v894, %v1008
  %v1010 = vsub.f32 1.0, %v1009
  %v1011 = vmul.f32 %v1008, %v1010
  %v1012 = vadd.f32 %v1008, %v1011
  %vm1013 = vweird.f32 %v894
  %vm1014 = vweird.f32 %v1008
  %vm1015 = vmor %vm1013, %vm1014
  %v1016 = vsel %vm1015, %v1008, %v1012
  %v1017 = vand.u32 2147483647, %v894
  %vm1018 = vcmp.eq.f32.partialorder %v1017, 8.507059e+37
  %v1019 = vand.u32 %v894, 2147483648
  %v1020 = vor.u32 1.1754944e-38, %v1019
  %v1021 = vsel %vm1018, %v1020, %v1016
  %v1022 = vmul.f32 1.0, %v1021
  %v1023 = vrcp.pop %v895
  %v1024 = vmul.f32 %v895, %v1023
  %v1025 = vsub.f32 1.0, %v1024
  %v1026 = vmul.f32 %v1023, %v1025
  %v1027 = vadd.f32 %v1023, %v1026
  %vm1028 = vweird.f32 %v895
  %vm1029 = vweird.f32 %v1023
  %vm1030 = vmor %vm1028, %vm1029
  %v1031 = vsel %vm1030, %v1023, %v1027
  %v1032 = vand.u32 2147483647, %v895
  %vm1033 = vcmp.eq.f32.partialorder %v1032, 8.507059e+37
  %v1034 = vand.u32 %v895, 2147483648
  %v1035 = vor.u32 1.1754944e-38, %v1034
  %v1036 = vsel %vm1033, %v1035, %v1031
  %v1037 = vmul.f32 1.0, %v1036
  %v1038 = vrcp.pop %v896
  %v1039 = vmul.f32 %v896, %v1038
  %v1040 = vsub.f32 1.0, %v1039
  %v1041 = vmul.f32 %v1038, %v1040
  %v1042 = vadd.f32 %v1038, %v1041
  %vm1043 = vweird.f32 %v896
  %vm1044 = vweird.f32 %v1038
  %vm1045 = vmor %vm1043, %vm1044
  %v1046 = vsel %vm1045, %v1038, %v1042
  %v1047 = vand.u32 2147483647, %v896
  %vm1048 = vcmp.eq.f32.partialorder %v1047, 8.507059e+37
  %v1049 = vand.u32 %v896, 2147483648
  %v1050 = vor.u32 1.1754944e-38, %v1049
  %v1051 = vsel %vm1048, %v1050, %v1046
  %v1052 = vmul.f32 1.0, %v1051
  %v1053 = vrcp.pop %v897
  %v1054 = vmul.f32 %v897, %v1053
  %v1055 = vsub.f32 1.0, %v1054
  %v1056 = vmul.f32 %v1053, %v1055
  %v1057 = vadd.f32 %v1053, %v1056
  %vm1058 = vweird.f32 %v897
  %vm1059 = vweird.f32 %v1053
  %vm1060 = vmor %vm1058, %vm1059
  %v1061 = vsel %vm1060, %v1053, %v1057
  %v1062 = vand.u32 2147483647, %v897
  %vm1063 = vcmp.eq.f32.partialorder %v1062, 8.507059e+37
  %v1064 = vand.u32 %v897, 2147483648
  %v1065 = vor.u32 1.1754944e-38, %v1064
  %v1066 = vsel %vm1063, %v1065, %v1061
  %v1067 = vmul.f32 1.0, %v1066
  %v1068 = vrcp.pop %v898
  %v1069 = vmul.f32 %v898, %v1068
  %v1070 = vsub.f32 1.0, %v1069
  %v1071 = vmul.f32 %v1068, %v1070
  %v1072 = vadd.f32 %v1068, %v1071
  %vm1073 = vweird.f32 %v898
  %vm1074 = vweird.f32 %v1068
  %vm1075 = vmor %vm1073, %vm1074
  %v1076 = vsel %vm1075, %v1068, %v1072
  %v1077 = vand.u32 2147483647, %v898
  %vm1078 = vcmp.eq.f32.partialorder %v1077, 8.507059e+37
  %v1079 = vand.u32 %v898, 2147483648
  %v1080 = vor.u32 1.1754944e-38, %v1079
  %v1081 = vsel %vm1078, %v1080, %v1076
  %v1082 = vmul.f32 1.0, %v1081
  %v1083 = vrcp.pop %v899
  %v1084 = vmul.f32 %v899, %v1083
  %v1085 = vsub.f32 1.0, %v1084
  %v1086 = vmul.f32 %v1083, %v1085
  %v1087 = vadd.f32 %v1083, %v1086
  %vm1088 = vweird.f32 %v899
  %vm1089 = vweird.f32 %v1083
  %vm1090 = vmor %vm1088, %vm1089
  %v1091 = vsel %vm1090, %v1083, %v1087
  %v1092 = vand.u32 2147483647, %v899
  %vm1093 = vcmp.eq.f32.partialorder %v1092, 8.507059e+37
  %v1094 = vand.u32 %v899, 2147483648
  %v1095 = vor.u32 1.1754944e-38, %v1094
  %v1096 = vsel %vm1093, %v1095, %v1091
  %v1097 = vmul.f32 1.0, %v1096
  %v1098 = vrcp.pop %v900
  %v1099 = vmul.f32 %v900, %v1098
  %v1100 = vsub.f32 1.0, %v1099
  %v1101 = vmul.f32 %v1098, %v1100
  %v1102 = vadd.f32 %v1098, %v1101
  %vm1103 = vweird.f32 %v900
  %vm1104 = vweird.f32 %v1098
  %vm1105 = vmor %vm1103, %vm1104
  %v1106 = vsel %vm1105, %v1098, %v1102
  %v1107 = vand.u32 2147483647, %v900
  %vm1108 = vcmp.eq.f32.partialorder %v1107, 8.507059e+37
  %v1109 = vand.u32 %v900, 2147483648
  %v1110 = vor.u32 1.1754944e-38, %v1109
  %v1111 = vsel %vm1108, %v1110, %v1106
  %v1112 = vmul.f32 1.0, %v1111
  %v1113 = vrcp.pop %v901
  %v1114 = vmul.f32 %v901, %v1113
  %v1115 = vsub.f32 1.0, %v1114
  %v1116 = vmul.f32 %v1113, %v1115
  %v1117 = vadd.f32 %v1113, %v1116
  %vm1118 = vweird.f32 %v901
  %vm1119 = vweird.f32 %v1113
  %vm1120 = vmor %vm1118, %vm1119
  %v1121 = vsel %vm1120, %v1113, %v1117
  %v1122 = vand.u32 2147483647, %v901
  %vm1123 = vcmp.eq.f32.partialorder %v1122, 8.507059e+37
  %v1124 = vand.u32 %v901, 2147483648
  %v1125 = vor.u32 1.1754944e-38, %v1124
  %v1126 = vsel %vm1123, %v1125, %v1121
  %v1127 = vmul.f32 1.0, %v1126
  %v1128 = vrcp.pop %v902
  %v1129 = vmul.f32 %v902, %v1128
  %v1130 = vsub.f32 1.0, %v1129
  %v1131 = vmul.f32 %v1128, %v1130
  %v1132 = vadd.f32 %v1128, %v1131
  %vm1133 = vweird.f32 %v902
  %vm1134 = vweird.f32 %v1128
  %vm1135 = vmor %vm1133, %vm1134
  %v1136 = vsel %vm1135, %v1128, %v1132
  %v1137 = vand.u32 2147483647, %v902
  %vm1138 = vcmp.eq.f32.partialorder %v1137, 8.507059e+37
  %v1139 = vand.u32 %v902, 2147483648
  %v1140 = vor.u32 1.1754944e-38, %v1139
  %v1141 = vsel %vm1138, %v1140, %v1136
  %v1142 = vmul.f32 1.0, %v1141
  %1143 = vst [vmem:[%s3] sm:$0xff] %v917
  %1144 = vst [vmem:[%s3 + $0x8] sm:$0xff] %v932
  %1145 = vst [vmem:[%s3 + $0x10] sm:$0xff] %v947
  %1146 = vst [vmem:[%s3 + $0x18] sm:$0xff] %v962
  %1147 = vst [vmem:[%s3 + $0x20] sm:$0xff] %v977
  %1148 = vst [vmem:[%s3 + $0x28] sm:$0xff] %v992
  %1149 = vst [vmem:[%s3 + $0x30] sm:$0xff] %v1007
  %1150 = vst [vmem:[%s3 + $0x38] sm:$0xff] %v1022
  %1151 = vst [vmem:[%s3 + $0x40] sm:$0xff] %v1037
  %1152 = vst [vmem:[%s3 + $0x48] sm:$0xff] %v1052
  %1153 = vst [vmem:[%s3 + $0x50] sm:$0xff] %v1067
  %1154 = vst [vmem:[%s3 + $0x58] sm:$0xff] %v1082
  %1155 = vst [vmem:[%s3 + $0x60] sm:$0xff] %v1097
  %1156 = vst [vmem:[%s3 + $0x68] sm:$0xff] %v1112
  %1157 = vst [vmem:[%s3 + $0x70] sm:$0xff] %v1127
  %1158 = vst [vmem:[%s3 + $0x78] sm:$0xff] %v1142
  // Predicated region
  $region14: #{autoencoder_forward.7} parent=0 // pred_check
    _
  $region15: #{autoencoder_forward.7} parent=0 // pred_check_branch
    %1160 = sbr.rel (0) target = $region17
  $region16: #{autoencoder_forward.7} parent=0 // pred_region
    _
  $region17: #{autoencoder_forward.7} parent=0 // pred_fallthru
    _
  // Predicated region
  $region18: #{autoencoder_forward.7} parent=0 // pred_check
    _
  $region19: #{autoencoder_forward.7} parent=0 // pred_check_branch
    %1162 = sbr.rel (0) target = $region21
  $region20: #{autoencoder_forward.7} parent=0 // pred_region
    _
  $region21: #{autoencoder_forward.7} parent=0 // pred_fallthru
    _

</llo_original>
